<compile_context>
chip_gen: v6e
topology: v6e:2x2x1
jax: 0.10.0
libtpu: 0.0.40
codegen_flags: <defaults>
</compile_context>

<pallas_src>
from functools import partial

import jax
import jax.numpy as jnp
from jax.experimental import pallas as pl
from jax.experimental.pallas import tpu as pltpu

BLOCK = 4  # the PyTorch module asserts block_size == 4


def _round_up(x, m):
    return -(-x // m) * m


def _s2d_kernel(sel_ref, x_ref, o_ref, *, precision, acc_dtype):
    # sel_ref: (4*OWT, 4*OWT) one-hot, resident in VMEM across the whole grid.
    # x_ref  : (4*T, 4*OWT)   dense input block (N, C squeezed away).
    # o_ref  : (16, T, OWT)   output block (N, C squeezed away).
    bs = BLOCK
    T, OWT = o_ref.shape[-2], o_ref.shape[-1]
    sel = sel_ref[...]
    for bh in range(bs):
        # Sublane-strided read: rows h = 4*t + bh of the block (cheap vld, no reshape).
        rows = x_ref[pl.ds(bh, T, stride=bs), :]                      # (T, 4*OWT)
        # One fused selection matmul per bh: column (bw*OWT + ow) picks lane (4*ow + bw).
        y = jnp.dot(rows, sel, preferred_element_type=acc_dtype, precision=precision)
        for bw in range(bs):
            o_ref[bh * bs + bw] = y[:, bw * OWT:(bw + 1) * OWT].astype(o_ref.dtype)


def _choose_ow_tile(OW):
    """OW tile that (a) divides OW exactly (no garbage in the contraction) and
    (b) keeps the matmul contraction length 4*OWT <= ~512."""
    if OW <= 128:
        return OW
    if OW % 128 == 0:
        return 128
    for d in range(128, 7, -1):          # largest divisor <= 128
        if OW % d == 0:
            return d
    return OW                            # pathological (prime-ish OW): single full tile


def _choose_oh_tile(OH, WBLK, OWT, isz, acc_isz, budget):
    """Largest OH tile whose padded, double-buffered VMEM footprint (incl. the selection
    matrix, the strided-read copy and the matmul result) fits the per-chip budget."""
    K = BLOCK * OWT
    sel_b = _round_up(K, 8) * _round_up(K, 128) * isz

    def est(t):
        in_b = _round_up(BLOCK * t, 8) * _round_up(WBLK, 128) * isz       # x block
        out_b = 16 * _round_up(t, 8) * _round_up(OWT, 128) * isz          # out block
        rows_b = _round_up(t, 8) * _round_up(WBLK, 128) * isz             # strided-read copy
        y_b = _round_up(t, 8) * _round_up(K, 128) * acc_isz               # matmul result
        return 2 * (in_b + out_b) + sel_b + rows_b + y_b                  # 2x = double buffer

    if OH <= 8:
        return OH, est(OH)
    cands = list(range(8, OH + 1, 8))    # multiples of 8 (layout-legal with a masked tail)
    if OH % 8:
        cands.append(OH)                 # full-extent block is always layout-legal
    cands.sort(reverse=True)
    for t in cands:
        if est(t) <= budget:
            return t, est(t)
    return 8, est(8)


def space_to_depth(x):
    """SpaceToDepthModule.forward: (N, C, H, W) -> (N, 16*C, H//4, W//4)."""
    N, C, H, W = x.shape
    bs = BLOCK
    assert H % bs == 0 and W % bs == 0, "H and W must be multiples of 4"
    OH, OW = H // bs, W // bs
    isz = jnp.dtype(x.dtype).itemsize

    # --- tiling ---------------------------------------------------------------------
    OWT = _choose_ow_tile(OW)            # divides OW; caps contraction at 4*OWT
    WBLK = bs * OWT
    GOW = OW // OWT

    is_f32 = (x.dtype == jnp.float32)
    acc_dtype = jnp.float32 if is_f32 else x.dtype
    acc_isz = jnp.dtype(acc_dtype).itemsize
    precision = jax.lax.Precision.HIGHEST if is_f32 else jax.lax.Precision.DEFAULT

    try:
        vmem_cap = int(pltpu.get_tpu_info().vmem_capacity_bytes)   # 64 MiB v7x, 128 MiB v5e/v6e
    except Exception:
        vmem_cap = 64 << 20                                        # conservative fallback
    budget = vmem_cap // 4

    T, est = _choose_oh_tile(OH, WBLK, OWT, isz, acc_isz, budget)
    # v7x has 2 TensorCores: keep >= 2 parallel blocks for single-image calls.
    if N * C * GOW * pl.cdiv(OH, T) < 2 and OH > 8:
        T = max(8, _round_up(OH // 2, 8))
    GOH = pl.cdiv(OH, T)                 # partial OH tail handled by Pallas masking

    # --- precomputed one-hot selection matrix (resident in VMEM) ---------------------
    K = bs * OWT
    sel_dtype = x.dtype if jnp.issubdtype(x.dtype, jnp.floating) else jnp.float32
    # TODO(synk): integer dtypes need a non-MXU de-interleave path; float assumed here.
    col = jnp.arange(K, dtype=jnp.int32)
    sel = (jnp.arange(K, dtype=jnp.int32)[:, None]
           == bs * (col % OWT)[None, :] + (col // OWT)[None, :]).astype(sel_dtype)

    kernel = partial(_s2d_kernel, precision=precision, acc_dtype=acc_dtype)

    flops = 2 * N * C * GOH * GOW * bs * T * WBLK * K
    cost = pl.CostEstimate(flops=int(flops), transcendentals=0,
                           bytes_accessed=int(2 * N * C * H * W * isz))

    out5 = pl.pallas_call(
        kernel,
        out_shape=jax.ShapeDtypeStruct((N, bs * bs, C, OH, OW), x.dtype),
        grid_spec=pltpu.PrefetchScalarGridSpec(
            num_scalar_prefetch=0,
            grid=(N, C, GOH, GOW),
            in_specs=[
                # Selection matrix: constant index_map -> fetched once, stays in VMEM.
                pl.BlockSpec((K, K), lambda n, c, t, m: (0, 0)),
                # Dense (4*T, 4*OWT) input block straight from the NCHW array.
                pl.BlockSpec((None, None, bs * T, WBLK),
                             lambda n, c, t, m: (n, c, t, m)),
            ],
            out_specs=pl.BlockSpec((None, bs * bs, None, T, OWT),
                                   lambda n, c, t, m: (n, 0, c, t, m)),
        ),
        compiler_params=pltpu.CompilerParams(
            dimension_semantics=("parallel", "parallel", "parallel", "parallel"),
            vmem_limit_bytes=int(min(vmem_cap * 3 // 4, 2 * est + (8 << 20))),
        ),
        cost_estimate=cost,
    )(sel, x)

    # Free contiguous merge: (N, 16, C, OH, OW) -> (N, 16*C, OH, OW);
    # merged channel = (bh*4 + bw)*C + c, matching PyTorch's permute + view.
    return out5.reshape(N, bs * bs * C, OH, OW)


def space_to_depth_ref(x):
    """Pure-JAX mirror of the PyTorch forward."""
    N, C, H, W = x.shape
    bs = BLOCK
    y = x.reshape(N, C, H // bs, bs, W // bs, bs)
    y = jnp.transpose(y, (0, 3, 5, 1, 2, 4))
    return y.reshape(N, C * bs * bs, H // bs, W // bs)


if __name__ == "__main__":
    key = jax.random.PRNGKey(0)
    x = jax.random.normal(key, (2, 4, 16, 16), jnp.float32)

    out = jax.jit(space_to_depth)(x)
    out = jax.block_until_ready(out)

    ref = space_to_depth_ref(x)
    assert out.shape == (2, 4 * 16, 4, 4), out.shape
    assert jnp.max(jnp.abs(out - ref)) < 1e-5, "mismatch vs reference"
    print("KERNEL_OK")
</pallas_src>

<mosaic_0001>
module attributes {stable_mosaic.version = 11 : i64} {
  func.func @_s2d_kernel(%arg0: i32, %arg1: i32, %arg2: i32, %arg3: i32, %arg4: memref<16x16xf32, #tpu.memory_space<vmem>>, %arg5: memref<1x1x16x16xf32, #tpu.memory_space<vmem>>, %arg6: memref<1x16x1x4x4xf32, #tpu.memory_space<vmem>>) attributes {dimension_semantics = [#tpu.dimension_semantics<parallel>, #tpu.dimension_semantics<parallel>, #tpu.dimension_semantics<parallel>, #tpu.dimension_semantics<parallel>], iteration_bounds = array<i64: 2, 4, 1, 1>, scalar_prefetch = 0 : i64, scratch_operands = 0 : i64, tpu.core_type = #tpu.core_type<tc>, window_params = [{pipeline_mode = #tpu.pipeline_mode<synchronous>, transform_indices = @transform_0, window_bounds = array<i64: 16, 16>}, {transform_indices = @transform_1, window_bounds = array<i64: 1, 1, 16, 16>}, {transform_indices = @transform_2, window_bounds = array<i64: 1, 16, 1, 4, 4>}]} {
    %c0 = arith.constant 0 : index
    %c0_0 = arith.constant 0 : index
    %0 = vector.load %arg4[%c0, %c0_0] : memref<16x16xf32, #tpu.memory_space<vmem>>, vector<16x16xf32>
    %c0_1 = arith.constant 0 : index
    %c0_2 = arith.constant 0 : index
    %c0_3 = arith.constant 0 : index
    %c0_4 = arith.constant 0 : index
    %1 = tpu.strided_load %arg5[%c0_1, %c0_2, %c0_3, %c0_4] {strides = array<i32: 1, 1, 4, 1>} : memref<1x1x16x16xf32, #tpu.memory_space<vmem>>, vector<1x1x4x16xf32>
    %2 = vector.shape_cast %1 : vector<1x1x4x16xf32> to vector<4x16xf32>
    %cst = arith.constant dense<0.000000e+00> : vector<4x16xf32>
    %3 = tpu.matmul %2, %0, %cst {dimension_numbers = #tpu.dot_dimension_numbers<[1], [0], [0], [1], [0, 0, 1, 1], [], []>, precision = #tpu.contract_precision<fp32>} : vector<4x16xf32>, vector<16x16xf32>, vector<4x16xf32> -> vector<4x16xf32>
    %4 = vector.extract_strided_slice %3 {offsets = [0, 0], sizes = [4, 4], strides = [1, 1]} : vector<4x16xf32> to vector<4x4xf32>
    %c0_5 = arith.constant 0 : index
    %c0_6 = arith.constant 0 : index
    %c0_7 = arith.constant 0 : index
    %c0_8 = arith.constant 0 : index
    %c0_9 = arith.constant 0 : index
    %5 = vector.load %arg6[%c0_5, %c0_6, %c0_7, %c0_8, %c0_9] : memref<1x16x1x4x4xf32, #tpu.memory_space<vmem>>, vector<1x1x1x4x4xf32>
    %6 = vector.shape_cast %5 : vector<1x1x1x4x4xf32> to vector<4x4xf32>
    %7 = vector.shape_cast %4 : vector<4x4xf32> to vector<1x1x1x4x4xf32>
    tpu.vector_store %arg6[%c0_5, %c0_6, %c0_7, %c0_8, %c0_9], %7 {strides = array<i32>} : memref<1x16x1x4x4xf32, #tpu.memory_space<vmem>>, vector<1x1x1x4x4xf32>,
    %8 = vector.extract_strided_slice %3 {offsets = [0, 4], sizes = [4, 4], strides = [1, 1]} : vector<4x16xf32> to vector<4x4xf32>
    %c0_10 = arith.constant 0 : index
    %c1 = arith.constant 1 : index
    %c0_11 = arith.constant 0 : index
    %c0_12 = arith.constant 0 : index
    %c0_13 = arith.constant 0 : index
    %9 = vector.load %arg6[%c0_10, %c1, %c0_11, %c0_12, %c0_13] : memref<1x16x1x4x4xf32, #tpu.memory_space<vmem>>, vector<1x1x1x4x4xf32>
    %10 = vector.shape_cast %9 : vector<1x1x1x4x4xf32> to vector<4x4xf32>
    %11 = vector.shape_cast %8 : vector<4x4xf32> to vector<1x1x1x4x4xf32>
    tpu.vector_store %arg6[%c0_10, %c1, %c0_11, %c0_12, %c0_13], %11 {strides = array<i32>} : memref<1x16x1x4x4xf32, #tpu.memory_space<vmem>>, vector<1x1x1x4x4xf32>,
    %12 = vector.extract_strided_slice %3 {offsets = [0, 8], sizes = [4, 4], strides = [1, 1]} : vector<4x16xf32> to vector<4x4xf32>
    %c0_14 = arith.constant 0 : index
    %c2 = arith.constant 2 : index
    %c0_15 = arith.constant 0 : index
    %c0_16 = arith.constant 0 : index
    %c0_17 = arith.constant 0 : index
    %13 = vector.load %arg6[%c0_14, %c2, %c0_15, %c0_16, %c0_17] : memref<1x16x1x4x4xf32, #tpu.memory_space<vmem>>, vector<1x1x1x4x4xf32>
    %14 = vector.shape_cast %13 : vector<1x1x1x4x4xf32> to vector<4x4xf32>
    %15 = vector.shape_cast %12 : vector<4x4xf32> to vector<1x1x1x4x4xf32>
    tpu.vector_store %arg6[%c0_14, %c2, %c0_15, %c0_16, %c0_17], %15 {strides = array<i32>} : memref<1x16x1x4x4xf32, #tpu.memory_space<vmem>>, vector<1x1x1x4x4xf32>,
    %16 = vector.extract_strided_slice %3 {offsets = [0, 12], sizes = [4, 4], strides = [1, 1]} : vector<4x16xf32> to vector<4x4xf32>
    %c0_18 = arith.constant 0 : index
    %c3 = arith.constant 3 : index
    %c0_19 = arith.constant 0 : index
    %c0_20 = arith.constant 0 : index
    %c0_21 = arith.constant 0 : index
    %17 = vector.load %arg6[%c0_18, %c3, %c0_19, %c0_20, %c0_21] : memref<1x16x1x4x4xf32, #tpu.memory_space<vmem>>, vector<1x1x1x4x4xf32>
    %18 = vector.shape_cast %17 : vector<1x1x1x4x4xf32> to vector<4x4xf32>
    %19 = vector.shape_cast %16 : vector<4x4xf32> to vector<1x1x1x4x4xf32>
    tpu.vector_store %arg6[%c0_18, %c3, %c0_19, %c0_20, %c0_21], %19 {strides = array<i32>} : memref<1x16x1x4x4xf32, #tpu.memory_space<vmem>>, vector<1x1x1x4x4xf32>,
    %c0_22 = arith.constant 0 : index
    %c0_23 = arith.constant 0 : index
    %c1_24 = arith.constant 1 : index
    %c0_25 = arith.constant 0 : index
    %20 = tpu.strided_load %arg5[%c0_22, %c0_23, %c1_24, %c0_25] {strides = array<i32: 1, 1, 4, 1>} : memref<1x1x16x16xf32, #tpu.memory_space<vmem>>, vector<1x1x4x16xf32>
    %21 = vector.shape_cast %20 : vector<1x1x4x16xf32> to vector<4x16xf32>
    %cst_26 = arith.constant dense<0.000000e+00> : vector<4x16xf32>
    %22 = tpu.matmul %21, %0, %cst_26 {dimension_numbers = #tpu.dot_dimension_numbers<[1], [0], [0], [1], [0, 0, 1, 1], [], []>, precision = #tpu.contract_precision<fp32>} : vector<4x16xf32>, vector<16x16xf32>, vector<4x16xf32> -> vector<4x16xf32>
    %23 = vector.extract_strided_slice %22 {offsets = [0, 0], sizes = [4, 4], strides = [1, 1]} : vector<4x16xf32> to vector<4x4xf32>
    %c0_27 = arith.constant 0 : index
    %c4 = arith.constant 4 : index
    %c0_28 = arith.constant 0 : index
    %c0_29 = arith.constant 0 : index
    %c0_30 = arith.constant 0 : index
    %24 = vector.load %arg6[%c0_27, %c4, %c0_28, %c0_29, %c0_30] : memref<1x16x1x4x4xf32, #tpu.memory_space<vmem>>, vector<1x1x1x4x4xf32>
    %25 = vector.shape_cast %24 : vector<1x1x1x4x4xf32> to vector<4x4xf32>
    %26 = vector.shape_cast %23 : vector<4x4xf32> to vector<1x1x1x4x4xf32>
    tpu.vector_store %arg6[%c0_27, %c4, %c0_28, %c0_29, %c0_30], %26 {strides = array<i32>} : memref<1x16x1x4x4xf32, #tpu.memory_space<vmem>>, vector<1x1x1x4x4xf32>,
    %27 = vector.extract_strided_slice %22 {offsets = [0, 4], sizes = [4, 4], strides = [1, 1]} : vector<4x16xf32> to vector<4x4xf32>
    %c0_31 = arith.constant 0 : index
    %c5 = arith.constant 5 : index
    %c0_32 = arith.constant 0 : index
    %c0_33 = arith.constant 0 : index
    %c0_34 = arith.constant 0 : index
    %28 = vector.load %arg6[%c0_31, %c5, %c0_32, %c0_33, %c0_34] : memref<1x16x1x4x4xf32, #tpu.memory_space<vmem>>, vector<1x1x1x4x4xf32>
    %29 = vector.shape_cast %28 : vector<1x1x1x4x4xf32> to vector<4x4xf32>
    %30 = vector.shape_cast %27 : vector<4x4xf32> to vector<1x1x1x4x4xf32>
    tpu.vector_store %arg6[%c0_31, %c5, %c0_32, %c0_33, %c0_34], %30 {strides = array<i32>} : memref<1x16x1x4x4xf32, #tpu.memory_space<vmem>>, vector<1x1x1x4x4xf32>,
    %31 = vector.extract_strided_slice %22 {offsets = [0, 8], sizes = [4, 4], strides = [1, 1]} : vector<4x16xf32> to vector<4x4xf32>
    %c0_35 = arith.constant 0 : index
    %c6 = arith.constant 6 : index
    %c0_36 = arith.constant 0 : index
    %c0_37 = arith.constant 0 : index
    %c0_38 = arith.constant 0 : index
    %32 = vector.load %arg6[%c0_35, %c6, %c0_36, %c0_37, %c0_38] : memref<1x16x1x4x4xf32, #tpu.memory_space<vmem>>, vector<1x1x1x4x4xf32>
    %33 = vector.shape_cast %32 : vector<1x1x1x4x4xf32> to vector<4x4xf32>
    %34 = vector.shape_cast %31 : vector<4x4xf32> to vector<1x1x1x4x4xf32>
    tpu.vector_store %arg6[%c0_35, %c6, %c0_36, %c0_37, %c0_38], %34 {strides = array<i32>} : memref<1x16x1x4x4xf32, #tpu.memory_space<vmem>>, vector<1x1x1x4x4xf32>,
    %35 = vector.extract_strided_slice %22 {offsets = [0, 12], sizes = [4, 4], strides = [1, 1]} : vector<4x16xf32> to vector<4x4xf32>
    %c0_39 = arith.constant 0 : index
    %c7 = arith.constant 7 : index
    %c0_40 = arith.constant 0 : index
    %c0_41 = arith.constant 0 : index
    %c0_42 = arith.constant 0 : index
    %36 = vector.load %arg6[%c0_39, %c7, %c0_40, %c0_41, %c0_42] : memref<1x16x1x4x4xf32, #tpu.memory_space<vmem>>, vector<1x1x1x4x4xf32>
    %37 = vector.shape_cast %36 : vector<1x1x1x4x4xf32> to vector<4x4xf32>
    %38 = vector.shape_cast %35 : vector<4x4xf32> to vector<1x1x1x4x4xf32>
    tpu.vector_store %arg6[%c0_39, %c7, %c0_40, %c0_41, %c0_42], %38 {strides = array<i32>} : memref<1x16x1x4x4xf32, #tpu.memory_space<vmem>>, vector<1x1x1x4x4xf32>,
    %c0_43 = arith.constant 0 : index
    %c0_44 = arith.constant 0 : index
    %c2_45 = arith.constant 2 : index
    %c0_46 = arith.constant 0 : index
    %39 = tpu.strided_load %arg5[%c0_43, %c0_44, %c2_45, %c0_46] {strides = array<i32: 1, 1, 4, 1>} : memref<1x1x16x16xf32, #tpu.memory_space<vmem>>, vector<1x1x4x16xf32>
    %40 = vector.shape_cast %39 : vector<1x1x4x16xf32> to vector<4x16xf32>
    %cst_47 = arith.constant dense<0.000000e+00> : vector<4x16xf32>
    %41 = tpu.matmul %40, %0, %cst_47 {dimension_numbers = #tpu.dot_dimension_numbers<[1], [0], [0], [1], [0, 0, 1, 1], [], []>, precision = #tpu.contract_precision<fp32>} : vector<4x16xf32>, vector<16x16xf32>, vector<4x16xf32> -> vector<4x16xf32>
    %42 = vector.extract_strided_slice %41 {offsets = [0, 0], sizes = [4, 4], strides = [1, 1]} : vector<4x16xf32> to vector<4x4xf32>
    %c0_48 = arith.constant 0 : index
    %c8 = arith.constant 8 : index
    %c0_49 = arith.constant 0 : index
    %c0_50 = arith.constant 0 : index
    %c0_51 = arith.constant 0 : index
    %43 = vector.load %arg6[%c0_48, %c8, %c0_49, %c0_50, %c0_51] : memref<1x16x1x4x4xf32, #tpu.memory_space<vmem>>, vector<1x1x1x4x4xf32>
    %44 = vector.shape_cast %43 : vector<1x1x1x4x4xf32> to vector<4x4xf32>
    %45 = vector.shape_cast %42 : vector<4x4xf32> to vector<1x1x1x4x4xf32>
    tpu.vector_store %arg6[%c0_48, %c8, %c0_49, %c0_50, %c0_51], %45 {strides = array<i32>} : memref<1x16x1x4x4xf32, #tpu.memory_space<vmem>>, vector<1x1x1x4x4xf32>,
    %46 = vector.extract_strided_slice %41 {offsets = [0, 4], sizes = [4, 4], strides = [1, 1]} : vector<4x16xf32> to vector<4x4xf32>
    %c0_52 = arith.constant 0 : index
    %c9 = arith.constant 9 : index
    %c0_53 = arith.constant 0 : index
    %c0_54 = arith.constant 0 : index
    %c0_55 = arith.constant 0 : index
    %47 = vector.load %arg6[%c0_52, %c9, %c0_53, %c0_54, %c0_55] : memref<1x16x1x4x4xf32, #tpu.memory_space<vmem>>, vector<1x1x1x4x4xf32>
    %48 = vector.shape_cast %47 : vector<1x1x1x4x4xf32> to vector<4x4xf32>
    %49 = vector.shape_cast %46 : vector<4x4xf32> to vector<1x1x1x4x4xf32>
    tpu.vector_store %arg6[%c0_52, %c9, %c0_53, %c0_54, %c0_55], %49 {strides = array<i32>} : memref<1x16x1x4x4xf32, #tpu.memory_space<vmem>>, vector<1x1x1x4x4xf32>,
    %50 = vector.extract_strided_slice %41 {offsets = [0, 8], sizes = [4, 4], strides = [1, 1]} : vector<4x16xf32> to vector<4x4xf32>
    %c0_56 = arith.constant 0 : index
    %c10 = arith.constant 10 : index
    %c0_57 = arith.constant 0 : index
    %c0_58 = arith.constant 0 : index
    %c0_59 = arith.constant 0 : index
    %51 = vector.load %arg6[%c0_56, %c10, %c0_57, %c0_58, %c0_59] : memref<1x16x1x4x4xf32, #tpu.memory_space<vmem>>, vector<1x1x1x4x4xf32>
    %52 = vector.shape_cast %51 : vector<1x1x1x4x4xf32> to vector<4x4xf32>
    %53 = vector.shape_cast %50 : vector<4x4xf32> to vector<1x1x1x4x4xf32>
    tpu.vector_store %arg6[%c0_56, %c10, %c0_57, %c0_58, %c0_59], %53 {strides = array<i32>} : memref<1x16x1x4x4xf32, #tpu.memory_space<vmem>>, vector<1x1x1x4x4xf32>,
    %54 = vector.extract_strided_slice %41 {offsets = [0, 12], sizes = [4, 4], strides = [1, 1]} : vector<4x16xf32> to vector<4x4xf32>
    %c0_60 = arith.constant 0 : index
    %c11 = arith.constant 11 : index
    %c0_61 = arith.constant 0 : index
    %c0_62 = arith.constant 0 : index
    %c0_63 = arith.constant 0 : index
    %55 = vector.load %arg6[%c0_60, %c11, %c0_61, %c0_62, %c0_63] : memref<1x16x1x4x4xf32, #tpu.memory_space<vmem>>, vector<1x1x1x4x4xf32>
    %56 = vector.shape_cast %55 : vector<1x1x1x4x4xf32> to vector<4x4xf32>
    %57 = vector.shape_cast %54 : vector<4x4xf32> to vector<1x1x1x4x4xf32>
    tpu.vector_store %arg6[%c0_60, %c11, %c0_61, %c0_62, %c0_63], %57 {strides = array<i32>} : memref<1x16x1x4x4xf32, #tpu.memory_space<vmem>>, vector<1x1x1x4x4xf32>,
    %c0_64 = arith.constant 0 : index
    %c0_65 = arith.constant 0 : index
    %c3_66 = arith.constant 3 : index
    %c0_67 = arith.constant 0 : index
    %58 = tpu.strided_load %arg5[%c0_64, %c0_65, %c3_66, %c0_67] {strides = array<i32: 1, 1, 4, 1>} : memref<1x1x16x16xf32, #tpu.memory_space<vmem>>, vector<1x1x4x16xf32>
    %59 = vector.shape_cast %58 : vector<1x1x4x16xf32> to vector<4x16xf32>
    %cst_68 = arith.constant dense<0.000000e+00> : vector<4x16xf32>
    %60 = tpu.matmul %59, %0, %cst_68 {dimension_numbers = #tpu.dot_dimension_numbers<[1], [0], [0], [1], [0, 0, 1, 1], [], []>, precision = #tpu.contract_precision<fp32>} : vector<4x16xf32>, vector<16x16xf32>, vector<4x16xf32> -> vector<4x16xf32>
    %61 = vector.extract_strided_slice %60 {offsets = [0, 0], sizes = [4, 4], strides = [1, 1]} : vector<4x16xf32> to vector<4x4xf32>
    %c0_69 = arith.constant 0 : index
    %c12 = arith.constant 12 : index
    %c0_70 = arith.constant 0 : index
    %c0_71 = arith.constant 0 : index
    %c0_72 = arith.constant 0 : index
    %62 = vector.load %arg6[%c0_69, %c12, %c0_70, %c0_71, %c0_72] : memref<1x16x1x4x4xf32, #tpu.memory_space<vmem>>, vector<1x1x1x4x4xf32>
    %63 = vector.shape_cast %62 : vector<1x1x1x4x4xf32> to vector<4x4xf32>
    %64 = vector.shape_cast %61 : vector<4x4xf32> to vector<1x1x1x4x4xf32>
    tpu.vector_store %arg6[%c0_69, %c12, %c0_70, %c0_71, %c0_72], %64 {strides = array<i32>} : memref<1x16x1x4x4xf32, #tpu.memory_space<vmem>>, vector<1x1x1x4x4xf32>,
    %65 = vector.extract_strided_slice %60 {offsets = [0, 4], sizes = [4, 4], strides = [1, 1]} : vector<4x16xf32> to vector<4x4xf32>
    %c0_73 = arith.constant 0 : index
    %c13 = arith.constant 13 : index
    %c0_74 = arith.constant 0 : index
    %c0_75 = arith.constant 0 : index
    %c0_76 = arith.constant 0 : index
    %66 = vector.load %arg6[%c0_73, %c13, %c0_74, %c0_75, %c0_76] : memref<1x16x1x4x4xf32, #tpu.memory_space<vmem>>, vector<1x1x1x4x4xf32>
    %67 = vector.shape_cast %66 : vector<1x1x1x4x4xf32> to vector<4x4xf32>
    %68 = vector.shape_cast %65 : vector<4x4xf32> to vector<1x1x1x4x4xf32>
    tpu.vector_store %arg6[%c0_73, %c13, %c0_74, %c0_75, %c0_76], %68 {strides = array<i32>} : memref<1x16x1x4x4xf32, #tpu.memory_space<vmem>>, vector<1x1x1x4x4xf32>,
    %69 = vector.extract_strided_slice %60 {offsets = [0, 8], sizes = [4, 4], strides = [1, 1]} : vector<4x16xf32> to vector<4x4xf32>
    %c0_77 = arith.constant 0 : index
    %c14 = arith.constant 14 : index
    %c0_78 = arith.constant 0 : index
    %c0_79 = arith.constant 0 : index
    %c0_80 = arith.constant 0 : index
    %70 = vector.load %arg6[%c0_77, %c14, %c0_78, %c0_79, %c0_80] : memref<1x16x1x4x4xf32, #tpu.memory_space<vmem>>, vector<1x1x1x4x4xf32>
    %71 = vector.shape_cast %70 : vector<1x1x1x4x4xf32> to vector<4x4xf32>
    %72 = vector.shape_cast %69 : vector<4x4xf32> to vector<1x1x1x4x4xf32>
    tpu.vector_store %arg6[%c0_77, %c14, %c0_78, %c0_79, %c0_80], %72 {strides = array<i32>} : memref<1x16x1x4x4xf32, #tpu.memory_space<vmem>>, vector<1x1x1x4x4xf32>,
    %73 = vector.extract_strided_slice %60 {offsets = [0, 12], sizes = [4, 4], strides = [1, 1]} : vector<4x16xf32> to vector<4x4xf32>
    %c0_81 = arith.constant 0 : index
    %c15 = arith.constant 15 : index
    %c0_82 = arith.constant 0 : index
    %c0_83 = arith.constant 0 : index
    %c0_84 = arith.constant 0 : index
    %74 = vector.load %arg6[%c0_81, %c15, %c0_82, %c0_83, %c0_84] : memref<1x16x1x4x4xf32, #tpu.memory_space<vmem>>, vector<1x1x1x4x4xf32>
    %75 = vector.shape_cast %74 : vector<1x1x1x4x4xf32> to vector<4x4xf32>
    %76 = vector.shape_cast %73 : vector<4x4xf32> to vector<1x1x1x4x4xf32>
    tpu.vector_store %arg6[%c0_81, %c15, %c0_82, %c0_83, %c0_84], %76 {strides = array<i32>} : memref<1x16x1x4x4xf32, #tpu.memory_space<vmem>>, vector<1x1x1x4x4xf32>,
    return
  }
  func.func @transform_0(%arg0: i32, %arg1: i32, %arg2: i32, %arg3: i32) -> (i32, i32) {
    %c0_i32 = arith.constant 0 : i32
    %c0_i32_0 = arith.constant 0 : i32
    %c0_i32_1 = arith.constant 0 : i32
    return %c0_i32, %c0_i32_0 : i32, i32
  }
  func.func @transform_1(%arg0: i32, %arg1: i32, %arg2: i32, %arg3: i32) -> (i32, i32, i32, i32) {
    %c0_i32 = arith.constant 0 : i32
    return %arg0, %arg1, %arg2, %arg3 : i32, i32, i32, i32
  }
  func.func @transform_2(%arg0: i32, %arg1: i32, %arg2: i32, %arg3: i32) -> (i32, i32, i32, i32, i32) {
    %c0_i32 = arith.constant 0 : i32
    %c0_i32_0 = arith.constant 0 : i32
    return %arg0, %c0_i32, %arg1, %arg2, %arg3 : i32, i32, i32, i32, i32
  }
}

</mosaic_0001>

<llo_original>
// kernel: space_to_depth.1
$region0: #{space_to_depth.1}
  #allocation0 [shape = 'u32[]', space=smem, size = 0x4, offset = 0x4, fixed_abs, tag = 'smem constant byte address 0x4 - core index']
  #allocation1 [shape = 'u32[144,128]{1,0:T(1,128)}', space=vmem, size = 0x12000, scoped, tag = 'internal scratch']
  %s0 = inlined_call_operand.vmem [shape: f32[16,16], index: 0, kind: input, shape index: {}]
  %s1 = inlined_call_operand.hbm [shape: f32[2,4,16,16], index: 1, kind: input, shape index: {}]
  %s2 = inlined_call_operand.vmem [shape: f32[2,16,4,4,4], index: 2, kind: output, shape index: {}]
  %s3 = sld [smem:[#allocation0]]
  $region82: #{space_to_depth.1} parent=0
    _
  %s5 = ssub.s32 1, %s3
  %s6 = scalar_select 0, %s5, %s3
  $region1: #{space_to_depth.1} parent=0
    #allocation2 [shape = 'u8[16384]{0}', space=vmem, size = 0x4000, scoped, tag = 'input window, operand 1']
    #allocation3 [shape = 's32[2]{0}', space=sflag, size = 0x8, scoped, tag = 'scoped memory for space_to_depth.1']
    #allocation4 [shape = 'u8[65536]{0}', space=vmem, size = 0x10000, scoped, tag = 'output window, operand 0']
    %7 = vsyncpa [#allocation3], 0
    %s8 = scalar_lea.sflag [#allocation3], 1
    %9 = vsyncpa %s8, 0
    loop: start=0, step=1, limit=10
    $region2: #{space_to_depth.1} parent=1 // loop_pre_header
      _
    $region3: #{space_to_depth.1} parent=1 // loop_header
      %s11 = sphi 0, %s15
      %p12 = scmp.ge.s32.totalorder %s11, 10
      %s18 = sphi 0, %s44
      %s19 = sphi 0, %s40
      %s20 = sphi 0, %s36
      %s21 = sphi 0, %s32
      %s22 = sphi 0, %s18
      %s23 = sphi 0, %s19
      %s24 = sphi 0, %s20
      %s25 = sphi 0, %s21
      %s26 = sphi 0, %s22
      %s27 = sphi 0, %s23
      %s28 = sphi 0, %s24
      %s29 = sphi 0, %s25
      %s45 = sphi 0, %s45
      %s47 = sphi 0, %s45
      %s48 = sphi 0, %s47
      %s62 = sphi 0, %s48
      %s74 = sphi 0, %s76
      %s77 = sphi 0, %s74
      %s78 = sphi 0, %s77
      %s94 = sphi 0, %s78
      %s106 = sphi 0, %s108
      %s109 = sphi 0, %s106
      %s110 = sphi 0, %s109
      %s126 = sphi 0, %s110
    $region4: #{space_to_depth.1} parent=1 // loop_header_branch
      %14 = sbr.rel (%p12) target = $region8
    $region5: #{space_to_depth.1} parent=1 // loop_body
      %s16 = ssub.s32 %s11, 1
      %s17 = ssub.s32 %s11, 2
      %s30 = sadd.s32 1, %s21
      %p31 = scmp.ge.s32.totalorder %s30, 1
      %s32 = scalar_select %p31, 0, %s30
      %s33 = sadd.s32 1, %s20
      %s34 = scalar_select %p31, %s33, %s20
      %p35 = scmp.ge.s32.totalorder %s34, 1
      %s36 = scalar_select %p35, 0, %s34
      %s37 = sadd.s32 1, %s19
      %s38 = scalar_select %p35, %s37, %s19
      %p39 = scmp.ge.s32.totalorder %s38, 4
      %s40 = scalar_select %p39, 0, %s38
      %s41 = sadd.s32 1, %s18
      %s42 = scalar_select %p39, %s41, %s18
      %p43 = scmp.ge.s32.totalorder %s42, 2
      %s44 = scalar_select %p43, 0, %s42
      %s46 = sadd.s32 %s45, 1
      %p49 = scmp.eq.s32.totalorder %s11, 7
      %p50 = scmp.ne.s32.totalorder %s45, %s47
      %p51 = scmp.eq.s32.totalorder %s11, 0
      %p52 = por %p50, %p51
      %p53 = scmp.ne.s32.totalorder %s45, %s47
      %p54 = scmp.eq.s32.totalorder %s16, 7
      %p55 = por %p53, %p54
      %p56 = scmp.ne.s32.totalorder %s47, %s48
      %p57 = scmp.eq.s32.totalorder %s16, 0
      %p58 = por %p56, %p57
      %p59 = scmp.ne.s32.totalorder %s47, %s48
      %p60 = scmp.eq.s32.totalorder %s17, 7
      %p61 = por %p59, %p60
      %p63 = scmp.ne.s32.totalorder %s48, %s62
      %p64 = scmp.eq.s32.totalorder %s17, 0
      %p65 = por %p63, %p64
      %s66 = ssub.s32 %s18, %s44
      %s67 = ssub.s32 %s19, %s40
      %s68 = sor.u32 %s66, %s67
      %s69 = ssub.s32 %s20, %s36
      %s70 = sor.u32 %s68, %s69
      %s71 = ssub.s32 %s21, %s32
      %s72 = sor.u32 %s70, %s71
      %p73 = scmp.eq.s32.totalorder %s72, 0
      %s75 = sadd.s32 %s74, 1
      %s76 = scalar_select %p73, %s74, %s75
      %p79 = pneg %p73
      %p80 = scmp.eq.s32.totalorder %s11, 7
      %p81 = por %p79, %p80
      %p82 = scmp.ne.s32.totalorder %s74, %s77
      %p83 = scmp.eq.s32.totalorder %s11, 0
      %p84 = por %p82, %p83
      %p85 = scmp.ne.s32.totalorder %s74, %s77
      %p86 = scmp.eq.s32.totalorder %s16, 7
      %p87 = por %p85, %p86
      %p88 = scmp.ne.s32.totalorder %s77, %s78
      %p89 = scmp.eq.s32.totalorder %s16, 0
      %p90 = por %p88, %p89
      %p91 = scmp.ne.s32.totalorder %s77, %s78
      %p92 = scmp.eq.s32.totalorder %s17, 7
      %p93 = por %p91, %p92
      %p95 = scmp.ne.s32.totalorder %s78, %s94
      %p96 = scmp.eq.s32.totalorder %s17, 0
      %p97 = por %p95, %p96
      %s98 = ssub.s32 %s18, %s44
      %s99 = ssub.s32 %s19, %s40
      %s100 = sor.u32 %s98, %s99
      %s101 = ssub.s32 %s20, %s36
      %s102 = sor.u32 %s100, %s101
      %s103 = ssub.s32 %s21, %s32
      %s104 = sor.u32 %s102, %s103
      %p105 = scmp.eq.s32.totalorder %s104, 0
      %s107 = sadd.s32 %s106, 1
      %s108 = scalar_select %p105, %s106, %s107
      %p111 = pneg %p105
      %p112 = scmp.eq.s32.totalorder %s11, 7
      %p113 = por %p111, %p112
      %p114 = scmp.ne.s32.totalorder %s106, %s109
      %p115 = scmp.eq.s32.totalorder %s11, 0
      %p116 = por %p114, %p115
      %p117 = scmp.ne.s32.totalorder %s106, %s109
      %p118 = scmp.eq.s32.totalorder %s16, 7
      %p119 = por %p117, %p118
      %p120 = scmp.ne.s32.totalorder %s109, %s110
      %p121 = scmp.eq.s32.totalorder %s16, 0
      %p122 = por %p120, %p121
      %p123 = scmp.ne.s32.totalorder %s109, %s110
      %p124 = scmp.eq.s32.totalorder %s17, 7
      %p125 = por %p123, %p124
      %p127 = scmp.ne.s32.totalorder %s110, %s126
      %p128 = scmp.eq.s32.totalorder %s17, 0
      %p129 = por %p127, %p128
      %p130 = scmp.le.s32.totalorder 1, %s11
      %p131 = scmp.lt.s32.totalorder %s11, 9
      %p132 = pnand %p130, %p131
      %p133 = pneg %p132
      // Predicated region
      $region9: #{space_to_depth.1} parent=5 // pred_check
        _
      $region10: #{space_to_depth.1} parent=5 // pred_check_branch
        %135 = sbr.rel (%p132) target = $region12
      $region11: #{space_to_depth.1} parent=5 // pred_region
        %s136 = ssub.s32 %s11, 1
        // Predicated region
        $region13: #{space_to_depth.1} parent=11 // pred_check
          %p137 = pneg %p58
        $region14: #{space_to_depth.1} parent=11 // pred_check_branch
          %139 = sbr.rel (%p137) target = $region16
        $region15: #{space_to_depth.1} parent=11 // pred_region
          _
        $region16: #{space_to_depth.1} parent=11 // pred_fallthru
          _
      $region12: #{space_to_depth.1} parent=5 // pred_fallthru
        _
      %p140 = scmp.lt.s32.totalorder %s11, 8
      // Predicated region
      $region17: #{space_to_depth.1} parent=5 // pred_check
        %p141 = pneg %p140
      $region18: #{space_to_depth.1} parent=5 // pred_check_branch
        %143 = sbr.rel (%p141) target = $region20
      $region19: #{space_to_depth.1} parent=5 // pred_region
        // Predicated region
        $region21: #{space_to_depth.1} parent=19 // pred_check
          %p144 = pneg %p84
        $region22: #{space_to_depth.1} parent=19 // pred_check_branch
          %146 = sbr.rel (%p144) target = $region24
        $region23: #{space_to_depth.1} parent=19 // pred_region
          %s147 = sand.u32 %s74, 1
          %s148 = scalar_lea.sflag [#allocation3], %s147
          %s149 = sand.u32 %s74, 1
          %s150 = smul.addr %s149, 16
          %s151 = scalar_lea.vmem [#allocation2], %s150
          %s152 = smul.u32 2, %s20
          %s154 = ssub.s32 256, 256
          %155 = vsyncadd %s148, %s154
          %s156 = sadd.s32 %s21, %s152
          %s157 = smul.addr %s19, 2
          %s158 = sadd.s32 %s156, %s157
          %s159 = smul.addr %s18, 8
          %s160 = sadd.s32 %s158, %s159
          %s161 = smul.addr %s160, 128
          %s162 = scalar_lea.hbm %s1, %s161
          %s163 = sshll.u32 %s151, 4
          %s164 = int_to_ptr.vmem [resolvable:$true] %s163
          %169 = dma.hbm_to_vmem [thread:$0]  %s162, 256, %s164, %s148, 128, 128, 8
        $region24: #{space_to_depth.1} parent=19 // pred_fallthru
          _
      $region20: #{space_to_depth.1} parent=5 // pred_fallthru
        _
      %p170 = scmp.le.s32.totalorder 1, %s11
      %p171 = scmp.lt.s32.totalorder %s11, 9
      %p172 = pnand %p170, %p171
      %p173 = pneg %p172
      // Predicated region
      $region25: #{space_to_depth.1} parent=5 // pred_check
        _
      $region26: #{space_to_depth.1} parent=5 // pred_check_branch
        %175 = sbr.rel (%p172) target = $region28
      $region27: #{space_to_depth.1} parent=5 // pred_region
        %s176 = ssub.s32 %s11, 1
        %s177 = sand.u32 %s77, 1
        %s178 = scalar_lea.sflag [#allocation3], %s177
        %s179 = sand.u32 %s77, 1
        %s180 = smul.addr %s179, 16
        %s181 = scalar_lea.vmem [#allocation2], %s180
        // Predicated region
        $region29: #{space_to_depth.1} parent=27 // pred_check
          %p182 = pneg %p90
        $region30: #{space_to_depth.1} parent=27 // pred_check_branch
          %184 = sbr.rel (%p182) target = $region32
        $region31: #{space_to_depth.1} parent=27 // pred_region
          %185 = dma.done %s178, 256
        $region32: #{space_to_depth.1} parent=27 // pred_fallthru
          _
        %p186 = pneg %p58
        %p187 = pneg %p55
        %s188 = sand.u32 %s77, 1
        %s189 = scalar_lea.sflag [#allocation3], %s188
        %s190 = sand.u32 %s77, 1
        %s191 = smul.addr %s190, 16
        %s192 = scalar_lea.vmem [#allocation2], %s191
        %p193 = pneg %p90
        %p194 = pneg %p87
        %p195 = pneg %p122
        %p196 = pneg %p119
        %s197 = sand.u32 %s109, 1
        %s198 = sand.u32 %s109, 1
        %s199 = smul.addr %s198, 64
        %s200 = scalar_lea.vmem [#allocation4], %s199
        %s201 = smul.u32 2, %s24
        %v202 = vld [vmem:[%s0] sm:$0xff]
        %v203 = vld [vmem:[%s0 + $0x8] sm:$0xff]
        %v204 = vld [vmem:[%s181] ss:$4 sm:$0xf]
        %vm205 = vcmask 130048
        %v207 = vsel %vm205, %v204, 0
        %209 = vmatprep.subr.mxu0 0.0
        %210 = vmatpush1.msra.mxu0 0.0
        %211 = vmatprep.subr.mxu0 0.0
        %212 = vmatpush1.msra.mxu0 0.0
        %213 = vmatprep.subr.mxu0 0.0
        %214 = vmatpush1.msra.mxu0 0.0
        %215 = vmatprep.subr.mxu0 0.0
        %216 = vmatpush1.msra.mxu0 0.0
        %217 = vmatprep.subr.mxu0 0.0
        %218 = vmatpush1.msra.mxu0 0.0
        %219 = vmatprep.subr.mxu0 0.0
        %220 = vmatpush1.msra.mxu0 0.0
        %221 = vmatprep.subr.mxu0 0.0
        %222 = vmatpush1.msra.mxu0 0.0
        %223 = vmatprep.subr.mxu0 0.0
        %224 = vmatpush1.msra.mxu0 0.0
        %225 = vmatprep.subr.mxu0 0.0
        %226 = vmatpush1.msra.mxu0 0.0
        %227 = vmatprep.subr.mxu0 0.0
        %228 = vmatpush1.msra.mxu0 0.0
        %229 = vmatprep.subr.mxu0 0.0
        %230 = vmatpush1.msra.mxu0 0.0
        %231 = vmatprep.subr.mxu0 0.0
        %232 = vmatpush1.msra.mxu0 0.0
        %233 = vmatprep.subr.mxu0 0.0
        %234 = vmatpush1.msra.mxu0 0.0
        %235 = vmatprep.subr.mxu0 0.0
        %236 = vmatpush1.msra.mxu0 0.0
        %237 = vmatprep.subr.mxu0 0.0
        %v238 = vand.u32 %v203, 4294901760
        %239 = vmatpush1.msra.mxu0 %v238
        %240 = vmatprep.subr.mxu0 0.0
        %v241 = vand.u32 %v202, 4294901760
        %242 = vmatpush1.msra.mxu0 %v241
        %243 = vmatprep.subr.mxu0 0.0
        %244 = vmatpush2.msra.mxu0 0.0
        %245 = vmatprep.subr.mxu0 0.0
        %246 = vmatpush2.msra.mxu0 0.0
        %247 = vmatprep.subr.mxu0 0.0
        %248 = vmatpush2.msra.mxu0 0.0
        %249 = vmatprep.subr.mxu0 0.0
        %250 = vmatpush2.msra.mxu0 0.0
        %251 = vmatprep.subr.mxu0 0.0
        %252 = vmatpush2.msra.mxu0 0.0
        %253 = vmatprep.subr.mxu0 0.0
        %254 = vmatpush2.msra.mxu0 0.0
        %255 = vmatprep.subr.mxu0 0.0
        %256 = vmatpush2.msra.mxu0 0.0
        %257 = vmatprep.subr.mxu0 0.0
        %258 = vmatpush2.msra.mxu0 0.0
        %259 = vmatprep.subr.mxu0 0.0
        %260 = vmatpush2.msra.mxu0 0.0
        %261 = vmatprep.subr.mxu0 0.0
        %262 = vmatpush2.msra.mxu0 0.0
        %263 = vmatprep.subr.mxu0 0.0
        %264 = vmatpush2.msra.mxu0 0.0
        %265 = vmatprep.subr.mxu0 0.0
        %266 = vmatpush2.msra.mxu0 0.0
        %267 = vmatprep.subr.mxu0 0.0
        %268 = vmatpush2.msra.mxu0 0.0
        %269 = vmatprep.subr.mxu0 0.0
        %270 = vmatpush2.msra.mxu0 0.0
        %271 = vmatprep.subr.mxu0 0.0
        %272 = vmatpush2.msra.mxu0 0.0
        %273 = vmatprep.subr.mxu0 0.0
        %274 = vmatpush2.msra.mxu0 0.0
        %275 = vmatprep.mubr.f32.mxu0 0.0
        %v276 = vand.u32 %v207, 4294901760
        %v277 = vsub.f32 %v207, %v276
        %v278 = vand.u32 %v277, 4294901760
        %v279 = vsub.f32 %v277, %v278
        %v280 = vand.u32 %v279, 4294901760
        %281 = vmatmul.mubr.f32.gmra.mxu0 %v280
        %v282 = vpop.f32.mrf.mxu0
        %v283 = vadd.f32 0.0, %v282
        %v284 = vpop.f32.mrf.mxu0
        %285 = vdwg.mxu0
        %286 = vmatprep.subr.mxu0 0.0
        %287 = vmatpush1.msra.mxu0 0.0
        %288 = vmatprep.subr.mxu0 0.0
        %289 = vmatpush1.msra.mxu0 0.0
        %290 = vmatprep.subr.mxu0 0.0
        %291 = vmatpush1.msra.mxu0 0.0
        %292 = vmatprep.subr.mxu0 0.0
        %293 = vmatpush1.msra.mxu0 0.0
        %294 = vmatprep.subr.mxu0 0.0
        %295 = vmatpush1.msra.mxu0 0.0
        %296 = vmatprep.subr.mxu0 0.0
        %297 = vmatpush1.msra.mxu0 0.0
        %298 = vmatprep.subr.mxu0 0.0
        %299 = vmatpush1.msra.mxu0 0.0
        %300 = vmatprep.subr.mxu0 0.0
        %301 = vmatpush1.msra.mxu0 0.0
        %302 = vmatprep.subr.mxu0 0.0
        %303 = vmatpush1.msra.mxu0 0.0
        %304 = vmatprep.subr.mxu0 0.0
        %305 = vmatpush1.msra.mxu0 0.0
        %306 = vmatprep.subr.mxu0 0.0
        %307 = vmatpush1.msra.mxu0 0.0
        %308 = vmatprep.subr.mxu0 0.0
        %309 = vmatpush1.msra.mxu0 0.0
        %310 = vmatprep.subr.mxu0 0.0
        %311 = vmatpush1.msra.mxu0 0.0
        %312 = vmatprep.subr.mxu0 0.0
        %313 = vmatpush1.msra.mxu0 0.0
        %314 = vmatprep.subr.mxu0 0.0
        %v315 = vand.u32 %v203, 4294901760
        %v316 = vsub.f32 %v203, %v315
        %v317 = vand.u32 %v316, 4294901760
        %v318 = vsub.f32 %v316, %v317
        %v319 = vand.u32 %v318, 4294901760
        %320 = vmatpush1.msra.mxu0 %v319
        %321 = vmatprep.subr.mxu0 0.0
        %v322 = vand.u32 %v202, 4294901760
        %v323 = vsub.f32 %v202, %v322
        %v324 = vand.u32 %v323, 4294901760
        %v325 = vsub.f32 %v323, %v324
        %v326 = vand.u32 %v325, 4294901760
        %327 = vmatpush1.msra.mxu0 %v326
        %328 = vmatprep.subr.mxu0 0.0
        %329 = vmatpush2.msra.mxu0 0.0
        %330 = vmatprep.subr.mxu0 0.0
        %331 = vmatpush2.msra.mxu0 0.0
        %332 = vmatprep.subr.mxu0 0.0
        %333 = vmatpush2.msra.mxu0 0.0
        %334 = vmatprep.subr.mxu0 0.0
        %335 = vmatpush2.msra.mxu0 0.0
        %336 = vmatprep.subr.mxu0 0.0
        %337 = vmatpush2.msra.mxu0 0.0
        %338 = vmatprep.subr.mxu0 0.0
        %339 = vmatpush2.msra.mxu0 0.0
        %340 = vmatprep.subr.mxu0 0.0
        %341 = vmatpush2.msra.mxu0 0.0
        %342 = vmatprep.subr.mxu0 0.0
        %343 = vmatpush2.msra.mxu0 0.0
        %344 = vmatprep.subr.mxu0 0.0
        %345 = vmatpush2.msra.mxu0 0.0
        %346 = vmatprep.subr.mxu0 0.0
        %347 = vmatpush2.msra.mxu0 0.0
        %348 = vmatprep.subr.mxu0 0.0
        %349 = vmatpush2.msra.mxu0 0.0
        %350 = vmatprep.subr.mxu0 0.0
        %351 = vmatpush2.msra.mxu0 0.0
        %352 = vmatprep.subr.mxu0 0.0
        %353 = vmatpush2.msra.mxu0 0.0
        %354 = vmatprep.subr.mxu0 0.0
        %355 = vmatpush2.msra.mxu0 0.0
        %356 = vmatprep.subr.mxu0 0.0
        %357 = vmatpush2.msra.mxu0 0.0
        %358 = vmatprep.subr.mxu0 0.0
        %359 = vmatpush2.msra.mxu0 0.0
        %360 = vmatprep.mubr.f32.mxu0 0.0
        %v361 = vand.u32 %v207, 4294901760
        %362 = vmatmul.mubr.f32.gmra.mxu0 %v361
        %v363 = vpop.f32.mrf.mxu0
        %v364 = vadd.f32 %v283, %v363
        %v365 = vpop.f32.mrf.mxu0
        %366 = vdwg.mxu0
        %367 = vmatprep.subr.mxu0 0.0
        %368 = vmatpush1.msra.mxu0 0.0
        %369 = vmatprep.subr.mxu0 0.0
        %370 = vmatpush1.msra.mxu0 0.0
        %371 = vmatprep.subr.mxu0 0.0
        %372 = vmatpush1.msra.mxu0 0.0
        %373 = vmatprep.subr.mxu0 0.0
        %374 = vmatpush1.msra.mxu0 0.0
        %375 = vmatprep.subr.mxu0 0.0
        %376 = vmatpush1.msra.mxu0 0.0
        %377 = vmatprep.subr.mxu0 0.0
        %378 = vmatpush1.msra.mxu0 0.0
        %379 = vmatprep.subr.mxu0 0.0
        %380 = vmatpush1.msra.mxu0 0.0
        %381 = vmatprep.subr.mxu0 0.0
        %382 = vmatpush1.msra.mxu0 0.0
        %383 = vmatprep.subr.mxu0 0.0
        %384 = vmatpush1.msra.mxu0 0.0
        %385 = vmatprep.subr.mxu0 0.0
        %386 = vmatpush1.msra.mxu0 0.0
        %387 = vmatprep.subr.mxu0 0.0
        %388 = vmatpush1.msra.mxu0 0.0
        %389 = vmatprep.subr.mxu0 0.0
        %390 = vmatpush1.msra.mxu0 0.0
        %391 = vmatprep.subr.mxu0 0.0
        %392 = vmatpush1.msra.mxu0 0.0
        %393 = vmatprep.subr.mxu0 0.0
        %394 = vmatpush1.msra.mxu0 0.0
        %395 = vmatprep.subr.mxu0 0.0
        %v396 = vand.u32 %v203, 4294901760
        %v397 = vsub.f32 %v203, %v396
        %398 = vmatpush1.msra.mxu0 %v397
        %399 = vmatprep.subr.mxu0 0.0
        %v400 = vand.u32 %v202, 4294901760
        %v401 = vsub.f32 %v202, %v400
        %402 = vmatpush1.msra.mxu0 %v401
        %403 = vmatprep.subr.mxu0 0.0
        %404 = vmatpush2.msra.mxu0 0.0
        %405 = vmatprep.subr.mxu0 0.0
        %406 = vmatpush2.msra.mxu0 0.0
        %407 = vmatprep.subr.mxu0 0.0
        %408 = vmatpush2.msra.mxu0 0.0
        %409 = vmatprep.subr.mxu0 0.0
        %410 = vmatpush2.msra.mxu0 0.0
        %411 = vmatprep.subr.mxu0 0.0
        %412 = vmatpush2.msra.mxu0 0.0
        %413 = vmatprep.subr.mxu0 0.0
        %414 = vmatpush2.msra.mxu0 0.0
        %415 = vmatprep.subr.mxu0 0.0
        %416 = vmatpush2.msra.mxu0 0.0
        %417 = vmatprep.subr.mxu0 0.0
        %418 = vmatpush2.msra.mxu0 0.0
        %419 = vmatprep.subr.mxu0 0.0
        %420 = vmatpush2.msra.mxu0 0.0
        %421 = vmatprep.subr.mxu0 0.0
        %422 = vmatpush2.msra.mxu0 0.0
        %423 = vmatprep.subr.mxu0 0.0
        %424 = vmatpush2.msra.mxu0 0.0
        %425 = vmatprep.subr.mxu0 0.0
        %426 = vmatpush2.msra.mxu0 0.0
        %427 = vmatprep.subr.mxu0 0.0
        %428 = vmatpush2.msra.mxu0 0.0
        %429 = vmatprep.subr.mxu0 0.0
        %430 = vmatpush2.msra.mxu0 0.0
        %431 = vmatprep.subr.mxu0 0.0
        %432 = vmatpush2.msra.mxu0 0.0
        %433 = vmatprep.subr.mxu0 0.0
        %434 = vmatpush2.msra.mxu0 0.0
        %435 = vmatprep.mubr.f32.mxu0 0.0
        %v436 = vand.u32 %v207, 4294901760
        %v437 = vsub.f32 %v207, %v436
        %438 = vmatmul.mubr.f32.gmra.mxu0 %v437
        %v439 = vpop.f32.mrf.mxu0
        %v440 = vadd.f32 %v364, %v439
        %v441 = vpop.f32.mrf.mxu0
        %442 = vdwg.mxu0
        %443 = vmatprep.subr.mxu0 0.0
        %444 = vmatpush1.msra.mxu0 0.0
        %445 = vmatprep.subr.mxu0 0.0
        %446 = vmatpush1.msra.mxu0 0.0
        %447 = vmatprep.subr.mxu0 0.0
        %448 = vmatpush1.msra.mxu0 0.0
        %449 = vmatprep.subr.mxu0 0.0
        %450 = vmatpush1.msra.mxu0 0.0
        %451 = vmatprep.subr.mxu0 0.0
        %452 = vmatpush1.msra.mxu0 0.0
        %453 = vmatprep.subr.mxu0 0.0
        %454 = vmatpush1.msra.mxu0 0.0
        %455 = vmatprep.subr.mxu0 0.0
        %456 = vmatpush1.msra.mxu0 0.0
        %457 = vmatprep.subr.mxu0 0.0
        %458 = vmatpush1.msra.mxu0 0.0
        %459 = vmatprep.subr.mxu0 0.0
        %460 = vmatpush1.msra.mxu0 0.0
        %461 = vmatprep.subr.mxu0 0.0
        %462 = vmatpush1.msra.mxu0 0.0
        %463 = vmatprep.subr.mxu0 0.0
        %464 = vmatpush1.msra.mxu0 0.0
        %465 = vmatprep.subr.mxu0 0.0
        %466 = vmatpush1.msra.mxu0 0.0
        %467 = vmatprep.subr.mxu0 0.0
        %468 = vmatpush1.msra.mxu0 0.0
        %469 = vmatprep.subr.mxu0 0.0
        %470 = vmatpush1.msra.mxu0 0.0
        %471 = vmatprep.subr.mxu0 0.0
        %v472 = vand.u32 %v203, 4294901760
        %473 = vmatpush1.msra.mxu0 %v472
        %474 = vmatprep.subr.mxu0 0.0
        %v475 = vand.u32 %v202, 4294901760
        %476 = vmatpush1.msra.mxu0 %v475
        %477 = vmatprep.subr.mxu0 0.0
        %478 = vmatpush2.msra.mxu0 0.0
        %479 = vmatprep.subr.mxu0 0.0
        %480 = vmatpush2.msra.mxu0 0.0
        %481 = vmatprep.subr.mxu0 0.0
        %482 = vmatpush2.msra.mxu0 0.0
        %483 = vmatprep.subr.mxu0 0.0
        %484 = vmatpush2.msra.mxu0 0.0
        %485 = vmatprep.subr.mxu0 0.0
        %486 = vmatpush2.msra.mxu0 0.0
        %487 = vmatprep.subr.mxu0 0.0
        %488 = vmatpush2.msra.mxu0 0.0
        %489 = vmatprep.subr.mxu0 0.0
        %490 = vmatpush2.msra.mxu0 0.0
        %491 = vmatprep.subr.mxu0 0.0
        %492 = vmatpush2.msra.mxu0 0.0
        %493 = vmatprep.subr.mxu0 0.0
        %494 = vmatpush2.msra.mxu0 0.0
        %495 = vmatprep.subr.mxu0 0.0
        %496 = vmatpush2.msra.mxu0 0.0
        %497 = vmatprep.subr.mxu0 0.0
        %498 = vmatpush2.msra.mxu0 0.0
        %499 = vmatprep.subr.mxu0 0.0
        %500 = vmatpush2.msra.mxu0 0.0
        %501 = vmatprep.subr.mxu0 0.0
        %502 = vmatpush2.msra.mxu0 0.0
        %503 = vmatprep.subr.mxu0 0.0
        %504 = vmatpush2.msra.mxu0 0.0
        %505 = vmatprep.subr.mxu0 0.0
        %506 = vmatpush2.msra.mxu0 0.0
        %507 = vmatprep.subr.mxu0 0.0
        %508 = vmatpush2.msra.mxu0 0.0
        %509 = vmatprep.mubr.f32.mxu0 0.0
        %v510 = vand.u32 %v207, 4294901760
        %v511 = vsub.f32 %v207, %v510
        %v512 = vand.u32 %v511, 4294901760
        %513 = vmatmul.mubr.f32.gmra.mxu0 %v512
        %v514 = vpop.f32.mrf.mxu0
        %v515 = vadd.f32 %v440, %v514
        %v516 = vpop.f32.mrf.mxu0
        %517 = vdwg.mxu0
        %518 = vmatprep.subr.mxu0 0.0
        %519 = vmatpush1.msra.mxu0 0.0
        %520 = vmatprep.subr.mxu0 0.0
        %521 = vmatpush1.msra.mxu0 0.0
        %522 = vmatprep.subr.mxu0 0.0
        %523 = vmatpush1.msra.mxu0 0.0
        %524 = vmatprep.subr.mxu0 0.0
        %525 = vmatpush1.msra.mxu0 0.0
        %526 = vmatprep.subr.mxu0 0.0
        %527 = vmatpush1.msra.mxu0 0.0
        %528 = vmatprep.subr.mxu0 0.0
        %529 = vmatpush1.msra.mxu0 0.0
        %530 = vmatprep.subr.mxu0 0.0
        %531 = vmatpush1.msra.mxu0 0.0
        %532 = vmatprep.subr.mxu0 0.0
        %533 = vmatpush1.msra.mxu0 0.0
        %534 = vmatprep.subr.mxu0 0.0
        %535 = vmatpush1.msra.mxu0 0.0
        %536 = vmatprep.subr.mxu0 0.0
        %537 = vmatpush1.msra.mxu0 0.0
        %538 = vmatprep.subr.mxu0 0.0
        %539 = vmatpush1.msra.mxu0 0.0
        %540 = vmatprep.subr.mxu0 0.0
        %541 = vmatpush1.msra.mxu0 0.0
        %542 = vmatprep.subr.mxu0 0.0
        %543 = vmatpush1.msra.mxu0 0.0
        %544 = vmatprep.subr.mxu0 0.0
        %545 = vmatpush1.msra.mxu0 0.0
        %546 = vmatprep.subr.mxu0 0.0
        %v547 = vand.u32 %v203, 4294901760
        %v548 = vsub.f32 %v203, %v547
        %v549 = vand.u32 %v548, 4294901760
        %550 = vmatpush1.msra.mxu0 %v549
        %551 = vmatprep.subr.mxu0 0.0
        %v552 = vand.u32 %v202, 4294901760
        %v553 = vsub.f32 %v202, %v552
        %v554 = vand.u32 %v553, 4294901760
        %555 = vmatpush1.msra.mxu0 %v554
        %556 = vmatprep.subr.mxu0 0.0
        %557 = vmatpush2.msra.mxu0 0.0
        %558 = vmatprep.subr.mxu0 0.0
        %559 = vmatpush2.msra.mxu0 0.0
        %560 = vmatprep.subr.mxu0 0.0
        %561 = vmatpush2.msra.mxu0 0.0
        %562 = vmatprep.subr.mxu0 0.0
        %563 = vmatpush2.msra.mxu0 0.0
        %564 = vmatprep.subr.mxu0 0.0
        %565 = vmatpush2.msra.mxu0 0.0
        %566 = vmatprep.subr.mxu0 0.0
        %567 = vmatpush2.msra.mxu0 0.0
        %568 = vmatprep.subr.mxu0 0.0
        %569 = vmatpush2.msra.mxu0 0.0
        %570 = vmatprep.subr.mxu0 0.0
        %571 = vmatpush2.msra.mxu0 0.0
        %572 = vmatprep.subr.mxu0 0.0
        %573 = vmatpush2.msra.mxu0 0.0
        %574 = vmatprep.subr.mxu0 0.0
        %575 = vmatpush2.msra.mxu0 0.0
        %576 = vmatprep.subr.mxu0 0.0
        %577 = vmatpush2.msra.mxu0 0.0
        %578 = vmatprep.subr.mxu0 0.0
        %579 = vmatpush2.msra.mxu0 0.0
        %580 = vmatprep.subr.mxu0 0.0
        %581 = vmatpush2.msra.mxu0 0.0
        %582 = vmatprep.subr.mxu0 0.0
        %583 = vmatpush2.msra.mxu0 0.0
        %584 = vmatprep.subr.mxu0 0.0
        %585 = vmatpush2.msra.mxu0 0.0
        %586 = vmatprep.subr.mxu0 0.0
        %587 = vmatpush2.msra.mxu0 0.0
        %588 = vmatprep.mubr.f32.mxu0 0.0
        %v589 = vand.u32 %v207, 4294901760
        %590 = vmatmul.mubr.f32.gmra.mxu0 %v589
        %v591 = vpop.f32.mrf.mxu0
        %v592 = vadd.f32 %v515, %v591
        %v593 = vpop.f32.mrf.mxu0
        %594 = vdwg.mxu0
        %595 = vmatprep.subr.mxu0 0.0
        %596 = vmatpush1.msra.mxu0 0.0
        %597 = vmatprep.subr.mxu0 0.0
        %598 = vmatpush1.msra.mxu0 0.0
        %599 = vmatprep.subr.mxu0 0.0
        %600 = vmatpush1.msra.mxu0 0.0
        %601 = vmatprep.subr.mxu0 0.0
        %602 = vmatpush1.msra.mxu0 0.0
        %603 = vmatprep.subr.mxu0 0.0
        %604 = vmatpush1.msra.mxu0 0.0
        %605 = vmatprep.subr.mxu0 0.0
        %606 = vmatpush1.msra.mxu0 0.0
        %607 = vmatprep.subr.mxu0 0.0
        %608 = vmatpush1.msra.mxu0 0.0
        %609 = vmatprep.subr.mxu0 0.0
        %610 = vmatpush1.msra.mxu0 0.0
        %611 = vmatprep.subr.mxu0 0.0
        %612 = vmatpush1.msra.mxu0 0.0
        %613 = vmatprep.subr.mxu0 0.0
        %614 = vmatpush1.msra.mxu0 0.0
        %615 = vmatprep.subr.mxu0 0.0
        %616 = vmatpush1.msra.mxu0 0.0
        %617 = vmatprep.subr.mxu0 0.0
        %618 = vmatpush1.msra.mxu0 0.0
        %619 = vmatprep.subr.mxu0 0.0
        %620 = vmatpush1.msra.mxu0 0.0
        %621 = vmatprep.subr.mxu0 0.0
        %622 = vmatpush1.msra.mxu0 0.0
        %623 = vmatprep.subr.mxu0 0.0
        %v624 = vand.u32 %v203, 4294901760
        %625 = vmatpush1.msra.mxu0 %v624
        %626 = vmatprep.subr.mxu0 0.0
        %v627 = vand.u32 %v202, 4294901760
        %628 = vmatpush1.msra.mxu0 %v627
        %629 = vmatprep.subr.mxu0 0.0
        %630 = vmatpush2.msra.mxu0 0.0
        %631 = vmatprep.subr.mxu0 0.0
        %632 = vmatpush2.msra.mxu0 0.0
        %633 = vmatprep.subr.mxu0 0.0
        %634 = vmatpush2.msra.mxu0 0.0
        %635 = vmatprep.subr.mxu0 0.0
        %636 = vmatpush2.msra.mxu0 0.0
        %637 = vmatprep.subr.mxu0 0.0
        %638 = vmatpush2.msra.mxu0 0.0
        %639 = vmatprep.subr.mxu0 0.0
        %640 = vmatpush2.msra.mxu0 0.0
        %641 = vmatprep.subr.mxu0 0.0
        %642 = vmatpush2.msra.mxu0 0.0
        %643 = vmatprep.subr.mxu0 0.0
        %644 = vmatpush2.msra.mxu0 0.0
        %645 = vmatprep.subr.mxu0 0.0
        %646 = vmatpush2.msra.mxu0 0.0
        %647 = vmatprep.subr.mxu0 0.0
        %648 = vmatpush2.msra.mxu0 0.0
        %649 = vmatprep.subr.mxu0 0.0
        %650 = vmatpush2.msra.mxu0 0.0
        %651 = vmatprep.subr.mxu0 0.0
        %652 = vmatpush2.msra.mxu0 0.0
        %653 = vmatprep.subr.mxu0 0.0
        %654 = vmatpush2.msra.mxu0 0.0
        %655 = vmatprep.subr.mxu0 0.0
        %656 = vmatpush2.msra.mxu0 0.0
        %657 = vmatprep.subr.mxu0 0.0
        %658 = vmatpush2.msra.mxu0 0.0
        %659 = vmatprep.subr.mxu0 0.0
        %660 = vmatpush2.msra.mxu0 0.0
        %661 = vmatprep.mubr.f32.mxu0 0.0
        %v662 = vand.u32 %v207, 4294901760
        %663 = vmatmul.mubr.f32.gmra.mxu0 %v662
        %v664 = vpop.f32.mrf.mxu0
        %v665 = vadd.f32 %v592, %v664
        %v666 = vpop.f32.mrf.mxu0
        %667 = vdwg.mxu0
        %vm668 = vcmask 27648
        %669 = vst.msk [vmem:[%s200] sm:$0xf] %vm668, %v665
        %671 = vrot.lane.b32.xlu0 %v665, 124
        %v672 = vpop.permute.xlu0 %671
        %s674 = scalar_lea.vmem %s200, 4 [#allocation4]
        %675 = vst.msk [vmem:[%s674] sm:$0xf] %vm668, %v672
        %676 = vrot.lane.b32.xlu0 %v665, 120
        %v677 = vpop.permute.xlu0 %676
        %s679 = scalar_lea.vmem %s200, 8 [#allocation4]
        %680 = vst.msk [vmem:[%s679] sm:$0xf] %vm668, %v677
        %681 = vrot.lane.b32.xlu0 %v665, 116
        %v682 = vpop.permute.xlu0 %681
        %s684 = scalar_lea.vmem %s200, 12 [#allocation4]
        %685 = vst.msk [vmem:[%s684] sm:$0xf] %vm668, %v682
        %s686 = scalar_lea.vmem %s181, 1 [#allocation2]
        %v687 = vld [vmem:[%s686] ss:$4 sm:$0xf]
        %v689 = vsel %vm205, %v687, 0
        %691 = vmatprep.subr.mxu0 0.0
        %692 = vmatpush1.msra.mxu0 0.0
        %693 = vmatprep.subr.mxu0 0.0
        %694 = vmatpush1.msra.mxu0 0.0
        %695 = vmatprep.subr.mxu0 0.0
        %696 = vmatpush1.msra.mxu0 0.0
        %697 = vmatprep.subr.mxu0 0.0
        %698 = vmatpush1.msra.mxu0 0.0
        %699 = vmatprep.subr.mxu0 0.0
        %700 = vmatpush1.msra.mxu0 0.0
        %701 = vmatprep.subr.mxu0 0.0
        %702 = vmatpush1.msra.mxu0 0.0
        %703 = vmatprep.subr.mxu0 0.0
        %704 = vmatpush1.msra.mxu0 0.0
        %705 = vmatprep.subr.mxu0 0.0
        %706 = vmatpush1.msra.mxu0 0.0
        %707 = vmatprep.subr.mxu0 0.0
        %708 = vmatpush1.msra.mxu0 0.0
        %709 = vmatprep.subr.mxu0 0.0
        %710 = vmatpush1.msra.mxu0 0.0
        %711 = vmatprep.subr.mxu0 0.0
        %712 = vmatpush1.msra.mxu0 0.0
        %713 = vmatprep.subr.mxu0 0.0
        %714 = vmatpush1.msra.mxu0 0.0
        %715 = vmatprep.subr.mxu0 0.0
        %716 = vmatpush1.msra.mxu0 0.0
        %717 = vmatprep.subr.mxu0 0.0
        %718 = vmatpush1.msra.mxu0 0.0
        %719 = vmatprep.subr.mxu0 0.0
        %v720 = vand.u32 %v203, 4294901760
        %721 = vmatpush1.msra.mxu0 %v720
        %722 = vmatprep.subr.mxu0 0.0
        %v723 = vand.u32 %v202, 4294901760
        %724 = vmatpush1.msra.mxu0 %v723
        %725 = vmatprep.subr.mxu0 0.0
        %726 = vmatpush2.msra.mxu0 0.0
        %727 = vmatprep.subr.mxu0 0.0
        %728 = vmatpush2.msra.mxu0 0.0
        %729 = vmatprep.subr.mxu0 0.0
        %730 = vmatpush2.msra.mxu0 0.0
        %731 = vmatprep.subr.mxu0 0.0
        %732 = vmatpush2.msra.mxu0 0.0
        %733 = vmatprep.subr.mxu0 0.0
        %734 = vmatpush2.msra.mxu0 0.0
        %735 = vmatprep.subr.mxu0 0.0
        %736 = vmatpush2.msra.mxu0 0.0
        %737 = vmatprep.subr.mxu0 0.0
        %738 = vmatpush2.msra.mxu0 0.0
        %739 = vmatprep.subr.mxu0 0.0
        %740 = vmatpush2.msra.mxu0 0.0
        %741 = vmatprep.subr.mxu0 0.0
        %742 = vmatpush2.msra.mxu0 0.0
        %743 = vmatprep.subr.mxu0 0.0
        %744 = vmatpush2.msra.mxu0 0.0
        %745 = vmatprep.subr.mxu0 0.0
        %746 = vmatpush2.msra.mxu0 0.0
        %747 = vmatprep.subr.mxu0 0.0
        %748 = vmatpush2.msra.mxu0 0.0
        %749 = vmatprep.subr.mxu0 0.0
        %750 = vmatpush2.msra.mxu0 0.0
        %751 = vmatprep.subr.mxu0 0.0
        %752 = vmatpush2.msra.mxu0 0.0
        %753 = vmatprep.subr.mxu0 0.0
        %754 = vmatpush2.msra.mxu0 0.0
        %755 = vmatprep.subr.mxu0 0.0
        %756 = vmatpush2.msra.mxu0 0.0
        %757 = vmatprep.mubr.f32.mxu0 0.0
        %v758 = vand.u32 %v689, 4294901760
        %v759 = vsub.f32 %v689, %v758
        %v760 = vand.u32 %v759, 4294901760
        %v761 = vsub.f32 %v759, %v760
        %v762 = vand.u32 %v761, 4294901760
        %763 = vmatmul.mubr.f32.gmra.mxu0 %v762
        %v764 = vpop.f32.mrf.mxu0
        %v765 = vadd.f32 0.0, %v764
        %v766 = vpop.f32.mrf.mxu0
        %767 = vdwg.mxu0
        %768 = vmatprep.subr.mxu0 0.0
        %769 = vmatpush1.msra.mxu0 0.0
        %770 = vmatprep.subr.mxu0 0.0
        %771 = vmatpush1.msra.mxu0 0.0
        %772 = vmatprep.subr.mxu0 0.0
        %773 = vmatpush1.msra.mxu0 0.0
        %774 = vmatprep.subr.mxu0 0.0
        %775 = vmatpush1.msra.mxu0 0.0
        %776 = vmatprep.subr.mxu0 0.0
        %777 = vmatpush1.msra.mxu0 0.0
        %778 = vmatprep.subr.mxu0 0.0
        %779 = vmatpush1.msra.mxu0 0.0
        %780 = vmatprep.subr.mxu0 0.0
        %781 = vmatpush1.msra.mxu0 0.0
        %782 = vmatprep.subr.mxu0 0.0
        %783 = vmatpush1.msra.mxu0 0.0
        %784 = vmatprep.subr.mxu0 0.0
        %785 = vmatpush1.msra.mxu0 0.0
        %786 = vmatprep.subr.mxu0 0.0
        %787 = vmatpush1.msra.mxu0 0.0
        %788 = vmatprep.subr.mxu0 0.0
        %789 = vmatpush1.msra.mxu0 0.0
        %790 = vmatprep.subr.mxu0 0.0
        %791 = vmatpush1.msra.mxu0 0.0
        %792 = vmatprep.subr.mxu0 0.0
        %793 = vmatpush1.msra.mxu0 0.0
        %794 = vmatprep.subr.mxu0 0.0
        %795 = vmatpush1.msra.mxu0 0.0
        %796 = vmatprep.subr.mxu0 0.0
        %v797 = vand.u32 %v203, 4294901760
        %v798 = vsub.f32 %v203, %v797
        %v799 = vand.u32 %v798, 4294901760
        %v800 = vsub.f32 %v798, %v799
        %v801 = vand.u32 %v800, 4294901760
        %802 = vmatpush1.msra.mxu0 %v801
        %803 = vmatprep.subr.mxu0 0.0
        %v804 = vand.u32 %v202, 4294901760
        %v805 = vsub.f32 %v202, %v804
        %v806 = vand.u32 %v805, 4294901760
        %v807 = vsub.f32 %v805, %v806
        %v808 = vand.u32 %v807, 4294901760
        %809 = vmatpush1.msra.mxu0 %v808
        %810 = vmatprep.subr.mxu0 0.0
        %811 = vmatpush2.msra.mxu0 0.0
        %812 = vmatprep.subr.mxu0 0.0
        %813 = vmatpush2.msra.mxu0 0.0
        %814 = vmatprep.subr.mxu0 0.0
        %815 = vmatpush2.msra.mxu0 0.0
        %816 = vmatprep.subr.mxu0 0.0
        %817 = vmatpush2.msra.mxu0 0.0
        %818 = vmatprep.subr.mxu0 0.0
        %819 = vmatpush2.msra.mxu0 0.0
        %820 = vmatprep.subr.mxu0 0.0
        %821 = vmatpush2.msra.mxu0 0.0
        %822 = vmatprep.subr.mxu0 0.0
        %823 = vmatpush2.msra.mxu0 0.0
        %824 = vmatprep.subr.mxu0 0.0
        %825 = vmatpush2.msra.mxu0 0.0
        %826 = vmatprep.subr.mxu0 0.0
        %827 = vmatpush2.msra.mxu0 0.0
        %828 = vmatprep.subr.mxu0 0.0
        %829 = vmatpush2.msra.mxu0 0.0
        %830 = vmatprep.subr.mxu0 0.0
        %831 = vmatpush2.msra.mxu0 0.0
        %832 = vmatprep.subr.mxu0 0.0
        %833 = vmatpush2.msra.mxu0 0.0
        %834 = vmatprep.subr.mxu0 0.0
        %835 = vmatpush2.msra.mxu0 0.0
        %836 = vmatprep.subr.mxu0 0.0
        %837 = vmatpush2.msra.mxu0 0.0
        %838 = vmatprep.subr.mxu0 0.0
        %839 = vmatpush2.msra.mxu0 0.0
        %840 = vmatprep.subr.mxu0 0.0
        %841 = vmatpush2.msra.mxu0 0.0
        %842 = vmatprep.mubr.f32.mxu0 0.0
        %v843 = vand.u32 %v689, 4294901760
        %844 = vmatmul.mubr.f32.gmra.mxu0 %v843
        %v845 = vpop.f32.mrf.mxu0
        %v846 = vadd.f32 %v765, %v845
        %v847 = vpop.f32.mrf.mxu0
        %848 = vdwg.mxu0
        %849 = vmatprep.subr.mxu0 0.0
        %850 = vmatpush1.msra.mxu0 0.0
        %851 = vmatprep.subr.mxu0 0.0
        %852 = vmatpush1.msra.mxu0 0.0
        %853 = vmatprep.subr.mxu0 0.0
        %854 = vmatpush1.msra.mxu0 0.0
        %855 = vmatprep.subr.mxu0 0.0
        %856 = vmatpush1.msra.mxu0 0.0
        %857 = vmatprep.subr.mxu0 0.0
        %858 = vmatpush1.msra.mxu0 0.0
        %859 = vmatprep.subr.mxu0 0.0
        %860 = vmatpush1.msra.mxu0 0.0
        %861 = vmatprep.subr.mxu0 0.0
        %862 = vmatpush1.msra.mxu0 0.0
        %863 = vmatprep.subr.mxu0 0.0
        %864 = vmatpush1.msra.mxu0 0.0
        %865 = vmatprep.subr.mxu0 0.0
        %866 = vmatpush1.msra.mxu0 0.0
        %867 = vmatprep.subr.mxu0 0.0
        %868 = vmatpush1.msra.mxu0 0.0
        %869 = vmatprep.subr.mxu0 0.0
        %870 = vmatpush1.msra.mxu0 0.0
        %871 = vmatprep.subr.mxu0 0.0
        %872 = vmatpush1.msra.mxu0 0.0
        %873 = vmatprep.subr.mxu0 0.0
        %874 = vmatpush1.msra.mxu0 0.0
        %875 = vmatprep.subr.mxu0 0.0
        %876 = vmatpush1.msra.mxu0 0.0
        %877 = vmatprep.subr.mxu0 0.0
        %v878 = vand.u32 %v203, 4294901760
        %v879 = vsub.f32 %v203, %v878
        %880 = vmatpush1.msra.mxu0 %v879
        %881 = vmatprep.subr.mxu0 0.0
        %v882 = vand.u32 %v202, 4294901760
        %v883 = vsub.f32 %v202, %v882
        %884 = vmatpush1.msra.mxu0 %v883
        %885 = vmatprep.subr.mxu0 0.0
        %886 = vmatpush2.msra.mxu0 0.0
        %887 = vmatprep.subr.mxu0 0.0
        %888 = vmatpush2.msra.mxu0 0.0
        %889 = vmatprep.subr.mxu0 0.0
        %890 = vmatpush2.msra.mxu0 0.0
        %891 = vmatprep.subr.mxu0 0.0
        %892 = vmatpush2.msra.mxu0 0.0
        %893 = vmatprep.subr.mxu0 0.0
        %894 = vmatpush2.msra.mxu0 0.0
        %895 = vmatprep.subr.mxu0 0.0
        %896 = vmatpush2.msra.mxu0 0.0
        %897 = vmatprep.subr.mxu0 0.0
        %898 = vmatpush2.msra.mxu0 0.0
        %899 = vmatprep.subr.mxu0 0.0
        %900 = vmatpush2.msra.mxu0 0.0
        %901 = vmatprep.subr.mxu0 0.0
        %902 = vmatpush2.msra.mxu0 0.0
        %903 = vmatprep.subr.mxu0 0.0
        %904 = vmatpush2.msra.mxu0 0.0
        %905 = vmatprep.subr.mxu0 0.0
        %906 = vmatpush2.msra.mxu0 0.0
        %907 = vmatprep.subr.mxu0 0.0
        %908 = vmatpush2.msra.mxu0 0.0
        %909 = vmatprep.subr.mxu0 0.0
        %910 = vmatpush2.msra.mxu0 0.0
        %911 = vmatprep.subr.mxu0 0.0
        %912 = vmatpush2.msra.mxu0 0.0
        %913 = vmatprep.subr.mxu0 0.0
        %914 = vmatpush2.msra.mxu0 0.0
        %915 = vmatprep.subr.mxu0 0.0
        %916 = vmatpush2.msra.mxu0 0.0
        %917 = vmatprep.mubr.f32.mxu0 0.0
        %v918 = vand.u32 %v689, 4294901760
        %v919 = vsub.f32 %v689, %v918
        %920 = vmatmul.mubr.f32.gmra.mxu0 %v919
        %v921 = vpop.f32.mrf.mxu0
        %v922 = vadd.f32 %v846, %v921
        %v923 = vpop.f32.mrf.mxu0
        %924 = vdwg.mxu0
        %925 = vmatprep.subr.mxu0 0.0
        %926 = vmatpush1.msra.mxu0 0.0
        %927 = vmatprep.subr.mxu0 0.0
        %928 = vmatpush1.msra.mxu0 0.0
        %929 = vmatprep.subr.mxu0 0.0
        %930 = vmatpush1.msra.mxu0 0.0
        %931 = vmatprep.subr.mxu0 0.0
        %932 = vmatpush1.msra.mxu0 0.0
        %933 = vmatprep.subr.mxu0 0.0
        %934 = vmatpush1.msra.mxu0 0.0
        %935 = vmatprep.subr.mxu0 0.0
        %936 = vmatpush1.msra.mxu0 0.0
        %937 = vmatprep.subr.mxu0 0.0
        %938 = vmatpush1.msra.mxu0 0.0
        %939 = vmatprep.subr.mxu0 0.0
        %940 = vmatpush1.msra.mxu0 0.0
        %941 = vmatprep.subr.mxu0 0.0
        %942 = vmatpush1.msra.mxu0 0.0
        %943 = vmatprep.subr.mxu0 0.0
        %944 = vmatpush1.msra.mxu0 0.0
        %945 = vmatprep.subr.mxu0 0.0
        %946 = vmatpush1.msra.mxu0 0.0
        %947 = vmatprep.subr.mxu0 0.0
        %948 = vmatpush1.msra.mxu0 0.0
        %949 = vmatprep.subr.mxu0 0.0
        %950 = vmatpush1.msra.mxu0 0.0
        %951 = vmatprep.subr.mxu0 0.0
        %952 = vmatpush1.msra.mxu0 0.0
        %953 = vmatprep.subr.mxu0 0.0
        %v954 = vand.u32 %v203, 4294901760
        %955 = vmatpush1.msra.mxu0 %v954
        %956 = vmatprep.subr.mxu0 0.0
        %v957 = vand.u32 %v202, 4294901760
        %958 = vmatpush1.msra.mxu0 %v957
        %959 = vmatprep.subr.mxu0 0.0
        %960 = vmatpush2.msra.mxu0 0.0
        %961 = vmatprep.subr.mxu0 0.0
        %962 = vmatpush2.msra.mxu0 0.0
        %963 = vmatprep.subr.mxu0 0.0
        %964 = vmatpush2.msra.mxu0 0.0
        %965 = vmatprep.subr.mxu0 0.0
        %966 = vmatpush2.msra.mxu0 0.0
        %967 = vmatprep.subr.mxu0 0.0
        %968 = vmatpush2.msra.mxu0 0.0
        %969 = vmatprep.subr.mxu0 0.0
        %970 = vmatpush2.msra.mxu0 0.0
        %971 = vmatprep.subr.mxu0 0.0
        %972 = vmatpush2.msra.mxu0 0.0
        %973 = vmatprep.subr.mxu0 0.0
        %974 = vmatpush2.msra.mxu0 0.0
        %975 = vmatprep.subr.mxu0 0.0
        %976 = vmatpush2.msra.mxu0 0.0
        %977 = vmatprep.subr.mxu0 0.0
        %978 = vmatpush2.msra.mxu0 0.0
        %979 = vmatprep.subr.mxu0 0.0
        %980 = vmatpush2.msra.mxu0 0.0
        %981 = vmatprep.subr.mxu0 0.0
        %982 = vmatpush2.msra.mxu0 0.0
        %983 = vmatprep.subr.mxu0 0.0
        %984 = vmatpush2.msra.mxu0 0.0
        %985 = vmatprep.subr.mxu0 0.0
        %986 = vmatpush2.msra.mxu0 0.0
        %987 = vmatprep.subr.mxu0 0.0
        %988 = vmatpush2.msra.mxu0 0.0
        %989 = vmatprep.subr.mxu0 0.0
        %990 = vmatpush2.msra.mxu0 0.0
        %991 = vmatprep.mubr.f32.mxu0 0.0
        %v992 = vand.u32 %v689, 4294901760
        %v993 = vsub.f32 %v689, %v992
        %v994 = vand.u32 %v993, 4294901760
        %995 = vmatmul.mubr.f32.gmra.mxu0 %v994
        %v996 = vpop.f32.mrf.mxu0
        %v997 = vadd.f32 %v922, %v996
        %v998 = vpop.f32.mrf.mxu0
        %999 = vdwg.mxu0
        %1000 = vmatprep.subr.mxu0 0.0
        %1001 = vmatpush1.msra.mxu0 0.0
        %1002 = vmatprep.subr.mxu0 0.0
        %1003 = vmatpush1.msra.mxu0 0.0
        %1004 = vmatprep.subr.mxu0 0.0
        %1005 = vmatpush1.msra.mxu0 0.0
        %1006 = vmatprep.subr.mxu0 0.0
        %1007 = vmatpush1.msra.mxu0 0.0
        %1008 = vmatprep.subr.mxu0 0.0
        %1009 = vmatpush1.msra.mxu0 0.0
        %1010 = vmatprep.subr.mxu0 0.0
        %1011 = vmatpush1.msra.mxu0 0.0
        %1012 = vmatprep.subr.mxu0 0.0
        %1013 = vmatpush1.msra.mxu0 0.0
        %1014 = vmatprep.subr.mxu0 0.0
        %1015 = vmatpush1.msra.mxu0 0.0
        %1016 = vmatprep.subr.mxu0 0.0
        %1017 = vmatpush1.msra.mxu0 0.0
        %1018 = vmatprep.subr.mxu0 0.0
        %1019 = vmatpush1.msra.mxu0 0.0
        %1020 = vmatprep.subr.mxu0 0.0
        %1021 = vmatpush1.msra.mxu0 0.0
        %1022 = vmatprep.subr.mxu0 0.0
        %1023 = vmatpush1.msra.mxu0 0.0
        %1024 = vmatprep.subr.mxu0 0.0
        %1025 = vmatpush1.msra.mxu0 0.0
        %1026 = vmatprep.subr.mxu0 0.0
        %1027 = vmatpush1.msra.mxu0 0.0
        %1028 = vmatprep.subr.mxu0 0.0
        %v1029 = vand.u32 %v203, 4294901760
        %v1030 = vsub.f32 %v203, %v1029
        %v1031 = vand.u32 %v1030, 4294901760
        %1032 = vmatpush1.msra.mxu0 %v1031
        %1033 = vmatprep.subr.mxu0 0.0
        %v1034 = vand.u32 %v202, 4294901760
        %v1035 = vsub.f32 %v202, %v1034
        %v1036 = vand.u32 %v1035, 4294901760
        %1037 = vmatpush1.msra.mxu0 %v1036
        %1038 = vmatprep.subr.mxu0 0.0
        %1039 = vmatpush2.msra.mxu0 0.0
        %1040 = vmatprep.subr.mxu0 0.0
        %1041 = vmatpush2.msra.mxu0 0.0
        %1042 = vmatprep.subr.mxu0 0.0
        %1043 = vmatpush2.msra.mxu0 0.0
        %1044 = vmatprep.subr.mxu0 0.0
        %1045 = vmatpush2.msra.mxu0 0.0
        %1046 = vmatprep.subr.mxu0 0.0
        %1047 = vmatpush2.msra.mxu0 0.0
        %1048 = vmatprep.subr.mxu0 0.0
        %1049 = vmatpush2.msra.mxu0 0.0
        %1050 = vmatprep.subr.mxu0 0.0
        %1051 = vmatpush2.msra.mxu0 0.0
        %1052 = vmatprep.subr.mxu0 0.0
        %1053 = vmatpush2.msra.mxu0 0.0
        %1054 = vmatprep.subr.mxu0 0.0
        %1055 = vmatpush2.msra.mxu0 0.0
        %1056 = vmatprep.subr.mxu0 0.0
        %1057 = vmatpush2.msra.mxu0 0.0
        %1058 = vmatprep.subr.mxu0 0.0
        %1059 = vmatpush2.msra.mxu0 0.0
        %1060 = vmatprep.subr.mxu0 0.0
        %1061 = vmatpush2.msra.mxu0 0.0
        %1062 = vmatprep.subr.mxu0 0.0
        %1063 = vmatpush2.msra.mxu0 0.0
        %1064 = vmatprep.subr.mxu0 0.0
        %1065 = vmatpush2.msra.mxu0 0.0
        %1066 = vmatprep.subr.mxu0 0.0
        %1067 = vmatpush2.msra.mxu0 0.0
        %1068 = vmatprep.subr.mxu0 0.0
        %1069 = vmatpush2.msra.mxu0 0.0
        %1070 = vmatprep.mubr.f32.mxu0 0.0
        %v1071 = vand.u32 %v689, 4294901760
        %1072 = vmatmul.mubr.f32.gmra.mxu0 %v1071
        %v1073 = vpop.f32.mrf.mxu0
        %v1074 = vadd.f32 %v997, %v1073
        %v1075 = vpop.f32.mrf.mxu0
        %1076 = vdwg.mxu0
        %1077 = vmatprep.subr.mxu0 0.0
        %1078 = vmatpush1.msra.mxu0 0.0
        %1079 = vmatprep.subr.mxu0 0.0
        %1080 = vmatpush1.msra.mxu0 0.0
        %1081 = vmatprep.subr.mxu0 0.0
        %1082 = vmatpush1.msra.mxu0 0.0
        %1083 = vmatprep.subr.mxu0 0.0
        %1084 = vmatpush1.msra.mxu0 0.0
        %1085 = vmatprep.subr.mxu0 0.0
        %1086 = vmatpush1.msra.mxu0 0.0
        %1087 = vmatprep.subr.mxu0 0.0
        %1088 = vmatpush1.msra.mxu0 0.0
        %1089 = vmatprep.subr.mxu0 0.0
        %1090 = vmatpush1.msra.mxu0 0.0
        %1091 = vmatprep.subr.mxu0 0.0
        %1092 = vmatpush1.msra.mxu0 0.0
        %1093 = vmatprep.subr.mxu0 0.0
        %1094 = vmatpush1.msra.mxu0 0.0
        %1095 = vmatprep.subr.mxu0 0.0
        %1096 = vmatpush1.msra.mxu0 0.0
        %1097 = vmatprep.subr.mxu0 0.0
        %1098 = vmatpush1.msra.mxu0 0.0
        %1099 = vmatprep.subr.mxu0 0.0
        %1100 = vmatpush1.msra.mxu0 0.0
        %1101 = vmatprep.subr.mxu0 0.0
        %1102 = vmatpush1.msra.mxu0 0.0
        %1103 = vmatprep.subr.mxu0 0.0
        %1104 = vmatpush1.msra.mxu0 0.0
        %1105 = vmatprep.subr.mxu0 0.0
        %v1106 = vand.u32 %v203, 4294901760
        %1107 = vmatpush1.msra.mxu0 %v1106
        %1108 = vmatprep.subr.mxu0 0.0
        %v1109 = vand.u32 %v202, 4294901760
        %1110 = vmatpush1.msra.mxu0 %v1109
        %1111 = vmatprep.subr.mxu0 0.0
        %1112 = vmatpush2.msra.mxu0 0.0
        %1113 = vmatprep.subr.mxu0 0.0
        %1114 = vmatpush2.msra.mxu0 0.0
        %1115 = vmatprep.subr.mxu0 0.0
        %1116 = vmatpush2.msra.mxu0 0.0
        %1117 = vmatprep.subr.mxu0 0.0
        %1118 = vmatpush2.msra.mxu0 0.0
        %1119 = vmatprep.subr.mxu0 0.0
        %1120 = vmatpush2.msra.mxu0 0.0
        %1121 = vmatprep.subr.mxu0 0.0
        %1122 = vmatpush2.msra.mxu0 0.0
        %1123 = vmatprep.subr.mxu0 0.0
        %1124 = vmatpush2.msra.mxu0 0.0
        %1125 = vmatprep.subr.mxu0 0.0
        %1126 = vmatpush2.msra.mxu0 0.0
        %1127 = vmatprep.subr.mxu0 0.0
        %1128 = vmatpush2.msra.mxu0 0.0
        %1129 = vmatprep.subr.mxu0 0.0
        %1130 = vmatpush2.msra.mxu0 0.0
        %1131 = vmatprep.subr.mxu0 0.0
        %1132 = vmatpush2.msra.mxu0 0.0
        %1133 = vmatprep.subr.mxu0 0.0
        %1134 = vmatpush2.msra.mxu0 0.0
        %1135 = vmatprep.subr.mxu0 0.0
        %1136 = vmatpush2.msra.mxu0 0.0
        %1137 = vmatprep.subr.mxu0 0.0
        %1138 = vmatpush2.msra.mxu0 0.0
        %1139 = vmatprep.subr.mxu0 0.0
        %1140 = vmatpush2.msra.mxu0 0.0
        %1141 = vmatprep.subr.mxu0 0.0
        %1142 = vmatpush2.msra.mxu0 0.0
        %1143 = vmatprep.mubr.f32.mxu0 0.0
        %v1144 = vand.u32 %v689, 4294901760
        %1145 = vmatmul.mubr.f32.gmra.mxu0 %v1144
        %v1146 = vpop.f32.mrf.mxu0
        %v1147 = vadd.f32 %v1074, %v1146
        %v1148 = vpop.f32.mrf.mxu0
        %1149 = vdwg.mxu0
        %s1150 = scalar_lea.vmem %s200, 16 [#allocation4]
        %1151 = vst.msk [vmem:[%s1150] sm:$0xf] %vm668, %v1147
        %1153 = vrot.lane.b32.xlu0 %v1147, 124
        %v1154 = vpop.permute.xlu0 %1153
        %s1156 = scalar_lea.vmem %s200, 20 [#allocation4]
        %1157 = vst.msk [vmem:[%s1156] sm:$0xf] %vm668, %v1154
        %1158 = vrot.lane.b32.xlu0 %v1147, 120
        %v1159 = vpop.permute.xlu0 %1158
        %s1161 = scalar_lea.vmem %s200, 24 [#allocation4]
        %1162 = vst.msk [vmem:[%s1161] sm:$0xf] %vm668, %v1159
        %1163 = vrot.lane.b32.xlu0 %v1147, 116
        %v1164 = vpop.permute.xlu0 %1163
        %s1166 = scalar_lea.vmem %s200, 28 [#allocation4]
        %1167 = vst.msk [vmem:[%s1166] sm:$0xf] %vm668, %v1164
        %s1168 = scalar_lea.vmem %s181, 2 [#allocation2]
        %v1169 = vld [vmem:[%s1168] ss:$4 sm:$0xf]
        %v1171 = vsel %vm205, %v1169, 0
        %1173 = vmatprep.subr.mxu0 0.0
        %1174 = vmatpush1.msra.mxu0 0.0
        %1175 = vmatprep.subr.mxu0 0.0
        %1176 = vmatpush1.msra.mxu0 0.0
        %1177 = vmatprep.subr.mxu0 0.0
        %1178 = vmatpush1.msra.mxu0 0.0
        %1179 = vmatprep.subr.mxu0 0.0
        %1180 = vmatpush1.msra.mxu0 0.0
        %1181 = vmatprep.subr.mxu0 0.0
        %1182 = vmatpush1.msra.mxu0 0.0
        %1183 = vmatprep.subr.mxu0 0.0
        %1184 = vmatpush1.msra.mxu0 0.0
        %1185 = vmatprep.subr.mxu0 0.0
        %1186 = vmatpush1.msra.mxu0 0.0
        %1187 = vmatprep.subr.mxu0 0.0
        %1188 = vmatpush1.msra.mxu0 0.0
        %1189 = vmatprep.subr.mxu0 0.0
        %1190 = vmatpush1.msra.mxu0 0.0
        %1191 = vmatprep.subr.mxu0 0.0
        %1192 = vmatpush1.msra.mxu0 0.0
        %1193 = vmatprep.subr.mxu0 0.0
        %1194 = vmatpush1.msra.mxu0 0.0
        %1195 = vmatprep.subr.mxu0 0.0
        %1196 = vmatpush1.msra.mxu0 0.0
        %1197 = vmatprep.subr.mxu0 0.0
        %1198 = vmatpush1.msra.mxu0 0.0
        %1199 = vmatprep.subr.mxu0 0.0
        %1200 = vmatpush1.msra.mxu0 0.0
        %1201 = vmatprep.subr.mxu0 0.0
        %v1202 = vand.u32 %v203, 4294901760
        %1203 = vmatpush1.msra.mxu0 %v1202
        %1204 = vmatprep.subr.mxu0 0.0
        %v1205 = vand.u32 %v202, 4294901760
        %1206 = vmatpush1.msra.mxu0 %v1205
        %1207 = vmatprep.subr.mxu0 0.0
        %1208 = vmatpush2.msra.mxu0 0.0
        %1209 = vmatprep.subr.mxu0 0.0
        %1210 = vmatpush2.msra.mxu0 0.0
        %1211 = vmatprep.subr.mxu0 0.0
        %1212 = vmatpush2.msra.mxu0 0.0
        %1213 = vmatprep.subr.mxu0 0.0
        %1214 = vmatpush2.msra.mxu0 0.0
        %1215 = vmatprep.subr.mxu0 0.0
        %1216 = vmatpush2.msra.mxu0 0.0
        %1217 = vmatprep.subr.mxu0 0.0
        %1218 = vmatpush2.msra.mxu0 0.0
        %1219 = vmatprep.subr.mxu0 0.0
        %1220 = vmatpush2.msra.mxu0 0.0
        %1221 = vmatprep.subr.mxu0 0.0
        %1222 = vmatpush2.msra.mxu0 0.0
        %1223 = vmatprep.subr.mxu0 0.0
        %1224 = vmatpush2.msra.mxu0 0.0
        %1225 = vmatprep.subr.mxu0 0.0
        %1226 = vmatpush2.msra.mxu0 0.0
        %1227 = vmatprep.subr.mxu0 0.0
        %1228 = vmatpush2.msra.mxu0 0.0
        %1229 = vmatprep.subr.mxu0 0.0
        %1230 = vmatpush2.msra.mxu0 0.0
        %1231 = vmatprep.subr.mxu0 0.0
        %1232 = vmatpush2.msra.mxu0 0.0
        %1233 = vmatprep.subr.mxu0 0.0
        %1234 = vmatpush2.msra.mxu0 0.0
        %1235 = vmatprep.subr.mxu0 0.0
        %1236 = vmatpush2.msra.mxu0 0.0
        %1237 = vmatprep.subr.mxu0 0.0
        %1238 = vmatpush2.msra.mxu0 0.0
        %1239 = vmatprep.mubr.f32.mxu0 0.0
        %v1240 = vand.u32 %v1171, 4294901760
        %v1241 = vsub.f32 %v1171, %v1240
        %v1242 = vand.u32 %v1241, 4294901760
        %v1243 = vsub.f32 %v1241, %v1242
        %v1244 = vand.u32 %v1243, 4294901760
        %1245 = vmatmul.mubr.f32.gmra.mxu0 %v1244
        %v1246 = vpop.f32.mrf.mxu0
        %v1247 = vadd.f32 0.0, %v1246
        %v1248 = vpop.f32.mrf.mxu0
        %1249 = vdwg.mxu0
        %1250 = vmatprep.subr.mxu0 0.0
        %1251 = vmatpush1.msra.mxu0 0.0
        %1252 = vmatprep.subr.mxu0 0.0
        %1253 = vmatpush1.msra.mxu0 0.0
        %1254 = vmatprep.subr.mxu0 0.0
        %1255 = vmatpush1.msra.mxu0 0.0
        %1256 = vmatprep.subr.mxu0 0.0
        %1257 = vmatpush1.msra.mxu0 0.0
        %1258 = vmatprep.subr.mxu0 0.0
        %1259 = vmatpush1.msra.mxu0 0.0
        %1260 = vmatprep.subr.mxu0 0.0
        %1261 = vmatpush1.msra.mxu0 0.0
        %1262 = vmatprep.subr.mxu0 0.0
        %1263 = vmatpush1.msra.mxu0 0.0
        %1264 = vmatprep.subr.mxu0 0.0
        %1265 = vmatpush1.msra.mxu0 0.0
        %1266 = vmatprep.subr.mxu0 0.0
        %1267 = vmatpush1.msra.mxu0 0.0
        %1268 = vmatprep.subr.mxu0 0.0
        %1269 = vmatpush1.msra.mxu0 0.0
        %1270 = vmatprep.subr.mxu0 0.0
        %1271 = vmatpush1.msra.mxu0 0.0
        %1272 = vmatprep.subr.mxu0 0.0
        %1273 = vmatpush1.msra.mxu0 0.0
        %1274 = vmatprep.subr.mxu0 0.0
        %1275 = vmatpush1.msra.mxu0 0.0
        %1276 = vmatprep.subr.mxu0 0.0
        %1277 = vmatpush1.msra.mxu0 0.0
        %1278 = vmatprep.subr.mxu0 0.0
        %v1279 = vand.u32 %v203, 4294901760
        %v1280 = vsub.f32 %v203, %v1279
        %v1281 = vand.u32 %v1280, 4294901760
        %v1282 = vsub.f32 %v1280, %v1281
        %v1283 = vand.u32 %v1282, 4294901760
        %1284 = vmatpush1.msra.mxu0 %v1283
        %1285 = vmatprep.subr.mxu0 0.0
        %v1286 = vand.u32 %v202, 4294901760
        %v1287 = vsub.f32 %v202, %v1286
        %v1288 = vand.u32 %v1287, 4294901760
        %v1289 = vsub.f32 %v1287, %v1288
        %v1290 = vand.u32 %v1289, 4294901760
        %1291 = vmatpush1.msra.mxu0 %v1290
        %1292 = vmatprep.subr.mxu0 0.0
        %1293 = vmatpush2.msra.mxu0 0.0
        %1294 = vmatprep.subr.mxu0 0.0
        %1295 = vmatpush2.msra.mxu0 0.0
        %1296 = vmatprep.subr.mxu0 0.0
        %1297 = vmatpush2.msra.mxu0 0.0
        %1298 = vmatprep.subr.mxu0 0.0
        %1299 = vmatpush2.msra.mxu0 0.0
        %1300 = vmatprep.subr.mxu0 0.0
        %1301 = vmatpush2.msra.mxu0 0.0
        %1302 = vmatprep.subr.mxu0 0.0
        %1303 = vmatpush2.msra.mxu0 0.0
        %1304 = vmatprep.subr.mxu0 0.0
        %1305 = vmatpush2.msra.mxu0 0.0
        %1306 = vmatprep.subr.mxu0 0.0
        %1307 = vmatpush2.msra.mxu0 0.0
        %1308 = vmatprep.subr.mxu0 0.0
        %1309 = vmatpush2.msra.mxu0 0.0
        %1310 = vmatprep.subr.mxu0 0.0
        %1311 = vmatpush2.msra.mxu0 0.0
        %1312 = vmatprep.subr.mxu0 0.0
        %1313 = vmatpush2.msra.mxu0 0.0
        %1314 = vmatprep.subr.mxu0 0.0
        %1315 = vmatpush2.msra.mxu0 0.0
        %1316 = vmatprep.subr.mxu0 0.0
        %1317 = vmatpush2.msra.mxu0 0.0
        %1318 = vmatprep.subr.mxu0 0.0
        %1319 = vmatpush2.msra.mxu0 0.0
        %1320 = vmatprep.subr.mxu0 0.0
        %1321 = vmatpush2.msra.mxu0 0.0
        %1322 = vmatprep.subr.mxu0 0.0
        %1323 = vmatpush2.msra.mxu0 0.0
        %1324 = vmatprep.mubr.f32.mxu0 0.0
        %v1325 = vand.u32 %v1171, 4294901760
        %1326 = vmatmul.mubr.f32.gmra.mxu0 %v1325
        %v1327 = vpop.f32.mrf.mxu0
        %v1328 = vadd.f32 %v1247, %v1327
        %v1329 = vpop.f32.mrf.mxu0
        %1330 = vdwg.mxu0
        %1331 = vmatprep.subr.mxu0 0.0
        %1332 = vmatpush1.msra.mxu0 0.0
        %1333 = vmatprep.subr.mxu0 0.0
        %1334 = vmatpush1.msra.mxu0 0.0
        %1335 = vmatprep.subr.mxu0 0.0
        %1336 = vmatpush1.msra.mxu0 0.0
        %1337 = vmatprep.subr.mxu0 0.0
        %1338 = vmatpush1.msra.mxu0 0.0
        %1339 = vmatprep.subr.mxu0 0.0
        %1340 = vmatpush1.msra.mxu0 0.0
        %1341 = vmatprep.subr.mxu0 0.0
        %1342 = vmatpush1.msra.mxu0 0.0
        %1343 = vmatprep.subr.mxu0 0.0
        %1344 = vmatpush1.msra.mxu0 0.0
        %1345 = vmatprep.subr.mxu0 0.0
        %1346 = vmatpush1.msra.mxu0 0.0
        %1347 = vmatprep.subr.mxu0 0.0
        %1348 = vmatpush1.msra.mxu0 0.0
        %1349 = vmatprep.subr.mxu0 0.0
        %1350 = vmatpush1.msra.mxu0 0.0
        %1351 = vmatprep.subr.mxu0 0.0
        %1352 = vmatpush1.msra.mxu0 0.0
        %1353 = vmatprep.subr.mxu0 0.0
        %1354 = vmatpush1.msra.mxu0 0.0
        %1355 = vmatprep.subr.mxu0 0.0
        %1356 = vmatpush1.msra.mxu0 0.0
        %1357 = vmatprep.subr.mxu0 0.0
        %1358 = vmatpush1.msra.mxu0 0.0
        %1359 = vmatprep.subr.mxu0 0.0
        %v1360 = vand.u32 %v203, 4294901760
        %v1361 = vsub.f32 %v203, %v1360
        %1362 = vmatpush1.msra.mxu0 %v1361
        %1363 = vmatprep.subr.mxu0 0.0
        %v1364 = vand.u32 %v202, 4294901760
        %v1365 = vsub.f32 %v202, %v1364
        %1366 = vmatpush1.msra.mxu0 %v1365
        %1367 = vmatprep.subr.mxu0 0.0
        %1368 = vmatpush2.msra.mxu0 0.0
        %1369 = vmatprep.subr.mxu0 0.0
        %1370 = vmatpush2.msra.mxu0 0.0
        %1371 = vmatprep.subr.mxu0 0.0
        %1372 = vmatpush2.msra.mxu0 0.0
        %1373 = vmatprep.subr.mxu0 0.0
        %1374 = vmatpush2.msra.mxu0 0.0
        %1375 = vmatprep.subr.mxu0 0.0
        %1376 = vmatpush2.msra.mxu0 0.0
        %1377 = vmatprep.subr.mxu0 0.0
        %1378 = vmatpush2.msra.mxu0 0.0
        %1379 = vmatprep.subr.mxu0 0.0
        %1380 = vmatpush2.msra.mxu0 0.0
        %1381 = vmatprep.subr.mxu0 0.0
        %1382 = vmatpush2.msra.mxu0 0.0
        %1383 = vmatprep.subr.mxu0 0.0
        %1384 = vmatpush2.msra.mxu0 0.0
        %1385 = vmatprep.subr.mxu0 0.0
        %1386 = vmatpush2.msra.mxu0 0.0
        %1387 = vmatprep.subr.mxu0 0.0
        %1388 = vmatpush2.msra.mxu0 0.0
        %1389 = vmatprep.subr.mxu0 0.0
        %1390 = vmatpush2.msra.mxu0 0.0
        %1391 = vmatprep.subr.mxu0 0.0
        %1392 = vmatpush2.msra.mxu0 0.0
        %1393 = vmatprep.subr.mxu0 0.0
        %1394 = vmatpush2.msra.mxu0 0.0
        %1395 = vmatprep.subr.mxu0 0.0
        %1396 = vmatpush2.msra.mxu0 0.0
        %1397 = vmatprep.subr.mxu0 0.0
        %1398 = vmatpush2.msra.mxu0 0.0
        %1399 = vmatprep.mubr.f32.mxu0 0.0
        %v1400 = vand.u32 %v1171, 4294901760
        %v1401 = vsub.f32 %v1171, %v1400
        %1402 = vmatmul.mubr.f32.gmra.mxu0 %v1401
        %v1403 = vpop.f32.mrf.mxu0
        %v1404 = vadd.f32 %v1328, %v1403
        %v1405 = vpop.f32.mrf.mxu0
        %1406 = vdwg.mxu0
        %1407 = vmatprep.subr.mxu0 0.0
        %1408 = vmatpush1.msra.mxu0 0.0
        %1409 = vmatprep.subr.mxu0 0.0
        %1410 = vmatpush1.msra.mxu0 0.0
        %1411 = vmatprep.subr.mxu0 0.0
        %1412 = vmatpush1.msra.mxu0 0.0
        %1413 = vmatprep.subr.mxu0 0.0
        %1414 = vmatpush1.msra.mxu0 0.0
        %1415 = vmatprep.subr.mxu0 0.0
        %1416 = vmatpush1.msra.mxu0 0.0
        %1417 = vmatprep.subr.mxu0 0.0
        %1418 = vmatpush1.msra.mxu0 0.0
        %1419 = vmatprep.subr.mxu0 0.0
        %1420 = vmatpush1.msra.mxu0 0.0
        %1421 = vmatprep.subr.mxu0 0.0
        %1422 = vmatpush1.msra.mxu0 0.0
        %1423 = vmatprep.subr.mxu0 0.0
        %1424 = vmatpush1.msra.mxu0 0.0
        %1425 = vmatprep.subr.mxu0 0.0
        %1426 = vmatpush1.msra.mxu0 0.0
        %1427 = vmatprep.subr.mxu0 0.0
        %1428 = vmatpush1.msra.mxu0 0.0
        %1429 = vmatprep.subr.mxu0 0.0
        %1430 = vmatpush1.msra.mxu0 0.0
        %1431 = vmatprep.subr.mxu0 0.0
        %1432 = vmatpush1.msra.mxu0 0.0
        %1433 = vmatprep.subr.mxu0 0.0
        %1434 = vmatpush1.msra.mxu0 0.0
        %1435 = vmatprep.subr.mxu0 0.0
        %v1436 = vand.u32 %v203, 4294901760
        %1437 = vmatpush1.msra.mxu0 %v1436
        %1438 = vmatprep.subr.mxu0 0.0
        %v1439 = vand.u32 %v202, 4294901760
        %1440 = vmatpush1.msra.mxu0 %v1439
        %1441 = vmatprep.subr.mxu0 0.0
        %1442 = vmatpush2.msra.mxu0 0.0
        %1443 = vmatprep.subr.mxu0 0.0
        %1444 = vmatpush2.msra.mxu0 0.0
        %1445 = vmatprep.subr.mxu0 0.0
        %1446 = vmatpush2.msra.mxu0 0.0
        %1447 = vmatprep.subr.mxu0 0.0
        %1448 = vmatpush2.msra.mxu0 0.0
        %1449 = vmatprep.subr.mxu0 0.0
        %1450 = vmatpush2.msra.mxu0 0.0
        %1451 = vmatprep.subr.mxu0 0.0
        %1452 = vmatpush2.msra.mxu0 0.0
        %1453 = vmatprep.subr.mxu0 0.0
        %1454 = vmatpush2.msra.mxu0 0.0
        %1455 = vmatprep.subr.mxu0 0.0
        %1456 = vmatpush2.msra.mxu0 0.0
        %1457 = vmatprep.subr.mxu0 0.0
        %1458 = vmatpush2.msra.mxu0 0.0
        %1459 = vmatprep.subr.mxu0 0.0
        %1460 = vmatpush2.msra.mxu0 0.0
        %1461 = vmatprep.subr.mxu0 0.0
        %1462 = vmatpush2.msra.mxu0 0.0
        %1463 = vmatprep.subr.mxu0 0.0
        %1464 = vmatpush2.msra.mxu0 0.0
        %1465 = vmatprep.subr.mxu0 0.0
        %1466 = vmatpush2.msra.mxu0 0.0
        %1467 = vmatprep.subr.mxu0 0.0
        %1468 = vmatpush2.msra.mxu0 0.0
        %1469 = vmatprep.subr.mxu0 0.0
        %1470 = vmatpush2.msra.mxu0 0.0
        %1471 = vmatprep.subr.mxu0 0.0
        %1472 = vmatpush2.msra.mxu0 0.0
        %1473 = vmatprep.mubr.f32.mxu0 0.0
        %v1474 = vand.u32 %v1171, 4294901760
        %v1475 = vsub.f32 %v1171, %v1474
        %v1476 = vand.u32 %v1475, 4294901760
        %1477 = vmatmul.mubr.f32.gmra.mxu0 %v1476
        %v1478 = vpop.f32.mrf.mxu0
        %v1479 = vadd.f32 %v1404, %v1478
        %v1480 = vpop.f32.mrf.mxu0
        %1481 = vdwg.mxu0
        %1482 = vmatprep.subr.mxu0 0.0
        %1483 = vmatpush1.msra.mxu0 0.0
        %1484 = vmatprep.subr.mxu0 0.0
        %1485 = vmatpush1.msra.mxu0 0.0
        %1486 = vmatprep.subr.mxu0 0.0
        %1487 = vmatpush1.msra.mxu0 0.0
        %1488 = vmatprep.subr.mxu0 0.0
        %1489 = vmatpush1.msra.mxu0 0.0
        %1490 = vmatprep.subr.mxu0 0.0
        %1491 = vmatpush1.msra.mxu0 0.0
        %1492 = vmatprep.subr.mxu0 0.0
        %1493 = vmatpush1.msra.mxu0 0.0
        %1494 = vmatprep.subr.mxu0 0.0
        %1495 = vmatpush1.msra.mxu0 0.0
        %1496 = vmatprep.subr.mxu0 0.0
        %1497 = vmatpush1.msra.mxu0 0.0
        %1498 = vmatprep.subr.mxu0 0.0
        %1499 = vmatpush1.msra.mxu0 0.0
        %1500 = vmatprep.subr.mxu0 0.0
        %1501 = vmatpush1.msra.mxu0 0.0
        %1502 = vmatprep.subr.mxu0 0.0
        %1503 = vmatpush1.msra.mxu0 0.0
        %1504 = vmatprep.subr.mxu0 0.0
        %1505 = vmatpush1.msra.mxu0 0.0
        %1506 = vmatprep.subr.mxu0 0.0
        %1507 = vmatpush1.msra.mxu0 0.0
        %1508 = vmatprep.subr.mxu0 0.0
        %1509 = vmatpush1.msra.mxu0 0.0
        %1510 = vmatprep.subr.mxu0 0.0
        %v1511 = vand.u32 %v203, 4294901760
        %v1512 = vsub.f32 %v203, %v1511
        %v1513 = vand.u32 %v1512, 4294901760
        %1514 = vmatpush1.msra.mxu0 %v1513
        %1515 = vmatprep.subr.mxu0 0.0
        %v1516 = vand.u32 %v202, 4294901760
        %v1517 = vsub.f32 %v202, %v1516
        %v1518 = vand.u32 %v1517, 4294901760
        %1519 = vmatpush1.msra.mxu0 %v1518
        %1520 = vmatprep.subr.mxu0 0.0
        %1521 = vmatpush2.msra.mxu0 0.0
        %1522 = vmatprep.subr.mxu0 0.0
        %1523 = vmatpush2.msra.mxu0 0.0
        %1524 = vmatprep.subr.mxu0 0.0
        %1525 = vmatpush2.msra.mxu0 0.0
        %1526 = vmatprep.subr.mxu0 0.0
        %1527 = vmatpush2.msra.mxu0 0.0
        %1528 = vmatprep.subr.mxu0 0.0
        %1529 = vmatpush2.msra.mxu0 0.0
        %1530 = vmatprep.subr.mxu0 0.0
        %1531 = vmatpush2.msra.mxu0 0.0
        %1532 = vmatprep.subr.mxu0 0.0
        %1533 = vmatpush2.msra.mxu0 0.0
        %1534 = vmatprep.subr.mxu0 0.0
        %1535 = vmatpush2.msra.mxu0 0.0
        %1536 = vmatprep.subr.mxu0 0.0
        %1537 = vmatpush2.msra.mxu0 0.0
        %1538 = vmatprep.subr.mxu0 0.0
        %1539 = vmatpush2.msra.mxu0 0.0
        %1540 = vmatprep.subr.mxu0 0.0
        %1541 = vmatpush2.msra.mxu0 0.0
        %1542 = vmatprep.subr.mxu0 0.0
        %1543 = vmatpush2.msra.mxu0 0.0
        %1544 = vmatprep.subr.mxu0 0.0
        %1545 = vmatpush2.msra.mxu0 0.0
        %1546 = vmatprep.subr.mxu0 0.0
        %1547 = vmatpush2.msra.mxu0 0.0
        %1548 = vmatprep.subr.mxu0 0.0
        %1549 = vmatpush2.msra.mxu0 0.0
        %1550 = vmatprep.subr.mxu0 0.0
        %1551 = vmatpush2.msra.mxu0 0.0
        %1552 = vmatprep.mubr.f32.mxu0 0.0
        %v1553 = vand.u32 %v1171, 4294901760
        %1554 = vmatmul.mubr.f32.gmra.mxu0 %v1553
        %v1555 = vpop.f32.mrf.mxu0
        %v1556 = vadd.f32 %v1479, %v1555
        %v1557 = vpop.f32.mrf.mxu0
        %1558 = vdwg.mxu0
        %1559 = vmatprep.subr.mxu0 0.0
        %1560 = vmatpush1.msra.mxu0 0.0
        %1561 = vmatprep.subr.mxu0 0.0
        %1562 = vmatpush1.msra.mxu0 0.0
        %1563 = vmatprep.subr.mxu0 0.0
        %1564 = vmatpush1.msra.mxu0 0.0
        %1565 = vmatprep.subr.mxu0 0.0
        %1566 = vmatpush1.msra.mxu0 0.0
        %1567 = vmatprep.subr.mxu0 0.0
        %1568 = vmatpush1.msra.mxu0 0.0
        %1569 = vmatprep.subr.mxu0 0.0
        %1570 = vmatpush1.msra.mxu0 0.0
        %1571 = vmatprep.subr.mxu0 0.0
        %1572 = vmatpush1.msra.mxu0 0.0
        %1573 = vmatprep.subr.mxu0 0.0
        %1574 = vmatpush1.msra.mxu0 0.0
        %1575 = vmatprep.subr.mxu0 0.0
        %1576 = vmatpush1.msra.mxu0 0.0
        %1577 = vmatprep.subr.mxu0 0.0
        %1578 = vmatpush1.msra.mxu0 0.0
        %1579 = vmatprep.subr.mxu0 0.0
        %1580 = vmatpush1.msra.mxu0 0.0
        %1581 = vmatprep.subr.mxu0 0.0
        %1582 = vmatpush1.msra.mxu0 0.0
        %1583 = vmatprep.subr.mxu0 0.0
        %1584 = vmatpush1.msra.mxu0 0.0
        %1585 = vmatprep.subr.mxu0 0.0
        %1586 = vmatpush1.msra.mxu0 0.0
        %1587 = vmatprep.subr.mxu0 0.0
        %v1588 = vand.u32 %v203, 4294901760
        %1589 = vmatpush1.msra.mxu0 %v1588
        %1590 = vmatprep.subr.mxu0 0.0
        %v1591 = vand.u32 %v202, 4294901760
        %1592 = vmatpush1.msra.mxu0 %v1591
        %1593 = vmatprep.subr.mxu0 0.0
        %1594 = vmatpush2.msra.mxu0 0.0
        %1595 = vmatprep.subr.mxu0 0.0
        %1596 = vmatpush2.msra.mxu0 0.0
        %1597 = vmatprep.subr.mxu0 0.0
        %1598 = vmatpush2.msra.mxu0 0.0
        %1599 = vmatprep.subr.mxu0 0.0
        %1600 = vmatpush2.msra.mxu0 0.0
        %1601 = vmatprep.subr.mxu0 0.0
        %1602 = vmatpush2.msra.mxu0 0.0
        %1603 = vmatprep.subr.mxu0 0.0
        %1604 = vmatpush2.msra.mxu0 0.0
        %1605 = vmatprep.subr.mxu0 0.0
        %1606 = vmatpush2.msra.mxu0 0.0
        %1607 = vmatprep.subr.mxu0 0.0
        %1608 = vmatpush2.msra.mxu0 0.0
        %1609 = vmatprep.subr.mxu0 0.0
        %1610 = vmatpush2.msra.mxu0 0.0
        %1611 = vmatprep.subr.mxu0 0.0
        %1612 = vmatpush2.msra.mxu0 0.0
        %1613 = vmatprep.subr.mxu0 0.0
        %1614 = vmatpush2.msra.mxu0 0.0
        %1615 = vmatprep.subr.mxu0 0.0
        %1616 = vmatpush2.msra.mxu0 0.0
        %1617 = vmatprep.subr.mxu0 0.0
        %1618 = vmatpush2.msra.mxu0 0.0
        %1619 = vmatprep.subr.mxu0 0.0
        %1620 = vmatpush2.msra.mxu0 0.0
        %1621 = vmatprep.subr.mxu0 0.0
        %1622 = vmatpush2.msra.mxu0 0.0
        %1623 = vmatprep.subr.mxu0 0.0
        %1624 = vmatpush2.msra.mxu0 0.0
        %1625 = vmatprep.mubr.f32.mxu0 0.0
        %v1626 = vand.u32 %v1171, 4294901760
        %1627 = vmatmul.mubr.f32.gmra.mxu0 %v1626
        %v1628 = vpop.f32.mrf.mxu0
        %v1629 = vadd.f32 %v1556, %v1628
        %v1630 = vpop.f32.mrf.mxu0
        %1631 = vdwg.mxu0
        %s1632 = scalar_lea.vmem %s200, 32 [#allocation4]
        %1633 = vst.msk [vmem:[%s1632] sm:$0xf] %vm668, %v1629
        %1635 = vrot.lane.b32.xlu0 %v1629, 124
        %v1636 = vpop.permute.xlu0 %1635
        %s1638 = scalar_lea.vmem %s200, 36 [#allocation4]
        %1639 = vst.msk [vmem:[%s1638] sm:$0xf] %vm668, %v1636
        %1640 = vrot.lane.b32.xlu0 %v1629, 120
        %v1641 = vpop.permute.xlu0 %1640
        %s1643 = scalar_lea.vmem %s200, 40 [#allocation4]
        %1644 = vst.msk [vmem:[%s1643] sm:$0xf] %vm668, %v1641
        %1645 = vrot.lane.b32.xlu0 %v1629, 116
        %v1646 = vpop.permute.xlu0 %1645
        %s1648 = scalar_lea.vmem %s200, 44 [#allocation4]
        %1649 = vst.msk [vmem:[%s1648] sm:$0xf] %vm668, %v1646
        %s1650 = scalar_lea.vmem %s181, 3 [#allocation2]
        %v1651 = vld [vmem:[%s1650] ss:$4 sm:$0xf]
        %v1653 = vsel %vm205, %v1651, 0
        %1655 = vmatprep.subr.mxu0 0.0
        %1656 = vmatpush1.msra.mxu0 0.0
        %1657 = vmatprep.subr.mxu0 0.0
        %1658 = vmatpush1.msra.mxu0 0.0
        %1659 = vmatprep.subr.mxu0 0.0
        %1660 = vmatpush1.msra.mxu0 0.0
        %1661 = vmatprep.subr.mxu0 0.0
        %1662 = vmatpush1.msra.mxu0 0.0
        %1663 = vmatprep.subr.mxu0 0.0
        %1664 = vmatpush1.msra.mxu0 0.0
        %1665 = vmatprep.subr.mxu0 0.0
        %1666 = vmatpush1.msra.mxu0 0.0
        %1667 = vmatprep.subr.mxu0 0.0
        %1668 = vmatpush1.msra.mxu0 0.0
        %1669 = vmatprep.subr.mxu0 0.0
        %1670 = vmatpush1.msra.mxu0 0.0
        %1671 = vmatprep.subr.mxu0 0.0
        %1672 = vmatpush1.msra.mxu0 0.0
        %1673 = vmatprep.subr.mxu0 0.0
        %1674 = vmatpush1.msra.mxu0 0.0
        %1675 = vmatprep.subr.mxu0 0.0
        %1676 = vmatpush1.msra.mxu0 0.0
        %1677 = vmatprep.subr.mxu0 0.0
        %1678 = vmatpush1.msra.mxu0 0.0
        %1679 = vmatprep.subr.mxu0 0.0
        %1680 = vmatpush1.msra.mxu0 0.0
        %1681 = vmatprep.subr.mxu0 0.0
        %1682 = vmatpush1.msra.mxu0 0.0
        %1683 = vmatprep.subr.mxu0 0.0
        %v1684 = vand.u32 %v203, 4294901760
        %1685 = vmatpush1.msra.mxu0 %v1684
        %1686 = vmatprep.subr.mxu0 0.0
        %v1687 = vand.u32 %v202, 4294901760
        %1688 = vmatpush1.msra.mxu0 %v1687
        %1689 = vmatprep.subr.mxu0 0.0
        %1690 = vmatpush2.msra.mxu0 0.0
        %1691 = vmatprep.subr.mxu0 0.0
        %1692 = vmatpush2.msra.mxu0 0.0
        %1693 = vmatprep.subr.mxu0 0.0
        %1694 = vmatpush2.msra.mxu0 0.0
        %1695 = vmatprep.subr.mxu0 0.0
        %1696 = vmatpush2.msra.mxu0 0.0
        %1697 = vmatprep.subr.mxu0 0.0
        %1698 = vmatpush2.msra.mxu0 0.0
        %1699 = vmatprep.subr.mxu0 0.0
        %1700 = vmatpush2.msra.mxu0 0.0
        %1701 = vmatprep.subr.mxu0 0.0
        %1702 = vmatpush2.msra.mxu0 0.0
        %1703 = vmatprep.subr.mxu0 0.0
        %1704 = vmatpush2.msra.mxu0 0.0
        %1705 = vmatprep.subr.mxu0 0.0
        %1706 = vmatpush2.msra.mxu0 0.0
        %1707 = vmatprep.subr.mxu0 0.0
        %1708 = vmatpush2.msra.mxu0 0.0
        %1709 = vmatprep.subr.mxu0 0.0
        %1710 = vmatpush2.msra.mxu0 0.0
        %1711 = vmatprep.subr.mxu0 0.0
        %1712 = vmatpush2.msra.mxu0 0.0
        %1713 = vmatprep.subr.mxu0 0.0
        %1714 = vmatpush2.msra.mxu0 0.0
        %1715 = vmatprep.subr.mxu0 0.0
        %1716 = vmatpush2.msra.mxu0 0.0
        %1717 = vmatprep.subr.mxu0 0.0
        %1718 = vmatpush2.msra.mxu0 0.0
        %1719 = vmatprep.subr.mxu0 0.0
        %1720 = vmatpush2.msra.mxu0 0.0
        %1721 = vmatprep.mubr.f32.mxu0 0.0
        %v1722 = vand.u32 %v1653, 4294901760
        %v1723 = vsub.f32 %v1653, %v1722
        %v1724 = vand.u32 %v1723, 4294901760
        %v1725 = vsub.f32 %v1723, %v1724
        %v1726 = vand.u32 %v1725, 4294901760
        %1727 = vmatmul.mubr.f32.gmra.mxu0 %v1726
        %v1728 = vpop.f32.mrf.mxu0
        %v1729 = vadd.f32 0.0, %v1728
        %v1730 = vpop.f32.mrf.mxu0
        %1731 = vdwg.mxu0
        %1732 = vmatprep.subr.mxu0 0.0
        %1733 = vmatpush1.msra.mxu0 0.0
        %1734 = vmatprep.subr.mxu0 0.0
        %1735 = vmatpush1.msra.mxu0 0.0
        %1736 = vmatprep.subr.mxu0 0.0
        %1737 = vmatpush1.msra.mxu0 0.0
        %1738 = vmatprep.subr.mxu0 0.0
        %1739 = vmatpush1.msra.mxu0 0.0
        %1740 = vmatprep.subr.mxu0 0.0
        %1741 = vmatpush1.msra.mxu0 0.0
        %1742 = vmatprep.subr.mxu0 0.0
        %1743 = vmatpush1.msra.mxu0 0.0
        %1744 = vmatprep.subr.mxu0 0.0
        %1745 = vmatpush1.msra.mxu0 0.0
        %1746 = vmatprep.subr.mxu0 0.0
        %1747 = vmatpush1.msra.mxu0 0.0
        %1748 = vmatprep.subr.mxu0 0.0
        %1749 = vmatpush1.msra.mxu0 0.0
        %1750 = vmatprep.subr.mxu0 0.0
        %1751 = vmatpush1.msra.mxu0 0.0
        %1752 = vmatprep.subr.mxu0 0.0
        %1753 = vmatpush1.msra.mxu0 0.0
        %1754 = vmatprep.subr.mxu0 0.0
        %1755 = vmatpush1.msra.mxu0 0.0
        %1756 = vmatprep.subr.mxu0 0.0
        %1757 = vmatpush1.msra.mxu0 0.0
        %1758 = vmatprep.subr.mxu0 0.0
        %1759 = vmatpush1.msra.mxu0 0.0
        %1760 = vmatprep.subr.mxu0 0.0
        %v1761 = vand.u32 %v203, 4294901760
        %v1762 = vsub.f32 %v203, %v1761
        %v1763 = vand.u32 %v1762, 4294901760
        %v1764 = vsub.f32 %v1762, %v1763
        %v1765 = vand.u32 %v1764, 4294901760
        %1766 = vmatpush1.msra.mxu0 %v1765
        %1767 = vmatprep.subr.mxu0 0.0
        %v1768 = vand.u32 %v202, 4294901760
        %v1769 = vsub.f32 %v202, %v1768
        %v1770 = vand.u32 %v1769, 4294901760
        %v1771 = vsub.f32 %v1769, %v1770
        %v1772 = vand.u32 %v1771, 4294901760
        %1773 = vmatpush1.msra.mxu0 %v1772
        %1774 = vmatprep.subr.mxu0 0.0
        %1775 = vmatpush2.msra.mxu0 0.0
        %1776 = vmatprep.subr.mxu0 0.0
        %1777 = vmatpush2.msra.mxu0 0.0
        %1778 = vmatprep.subr.mxu0 0.0
        %1779 = vmatpush2.msra.mxu0 0.0
        %1780 = vmatprep.subr.mxu0 0.0
        %1781 = vmatpush2.msra.mxu0 0.0
        %1782 = vmatprep.subr.mxu0 0.0
        %1783 = vmatpush2.msra.mxu0 0.0
        %1784 = vmatprep.subr.mxu0 0.0
        %1785 = vmatpush2.msra.mxu0 0.0
        %1786 = vmatprep.subr.mxu0 0.0
        %1787 = vmatpush2.msra.mxu0 0.0
        %1788 = vmatprep.subr.mxu0 0.0
        %1789 = vmatpush2.msra.mxu0 0.0
        %1790 = vmatprep.subr.mxu0 0.0
        %1791 = vmatpush2.msra.mxu0 0.0
        %1792 = vmatprep.subr.mxu0 0.0
        %1793 = vmatpush2.msra.mxu0 0.0
        %1794 = vmatprep.subr.mxu0 0.0
        %1795 = vmatpush2.msra.mxu0 0.0
        %1796 = vmatprep.subr.mxu0 0.0
        %1797 = vmatpush2.msra.mxu0 0.0
        %1798 = vmatprep.subr.mxu0 0.0
        %1799 = vmatpush2.msra.mxu0 0.0
        %1800 = vmatprep.subr.mxu0 0.0
        %1801 = vmatpush2.msra.mxu0 0.0
        %1802 = vmatprep.subr.mxu0 0.0
        %1803 = vmatpush2.msra.mxu0 0.0
        %1804 = vmatprep.subr.mxu0 0.0
        %1805 = vmatpush2.msra.mxu0 0.0
        %1806 = vmatprep.mubr.f32.mxu0 0.0
        %v1807 = vand.u32 %v1653, 4294901760
        %1808 = vmatmul.mubr.f32.gmra.mxu0 %v1807
        %v1809 = vpop.f32.mrf.mxu0
        %v1810 = vadd.f32 %v1729, %v1809
        %v1811 = vpop.f32.mrf.mxu0
        %1812 = vdwg.mxu0
        %1813 = vmatprep.subr.mxu0 0.0
        %1814 = vmatpush1.msra.mxu0 0.0
        %1815 = vmatprep.subr.mxu0 0.0
        %1816 = vmatpush1.msra.mxu0 0.0
        %1817 = vmatprep.subr.mxu0 0.0
        %1818 = vmatpush1.msra.mxu0 0.0
        %1819 = vmatprep.subr.mxu0 0.0
        %1820 = vmatpush1.msra.mxu0 0.0
        %1821 = vmatprep.subr.mxu0 0.0
        %1822 = vmatpush1.msra.mxu0 0.0
        %1823 = vmatprep.subr.mxu0 0.0
        %1824 = vmatpush1.msra.mxu0 0.0
        %1825 = vmatprep.subr.mxu0 0.0
        %1826 = vmatpush1.msra.mxu0 0.0
        %1827 = vmatprep.subr.mxu0 0.0
        %1828 = vmatpush1.msra.mxu0 0.0
        %1829 = vmatprep.subr.mxu0 0.0
        %1830 = vmatpush1.msra.mxu0 0.0
        %1831 = vmatprep.subr.mxu0 0.0
        %1832 = vmatpush1.msra.mxu0 0.0
        %1833 = vmatprep.subr.mxu0 0.0
        %1834 = vmatpush1.msra.mxu0 0.0
        %1835 = vmatprep.subr.mxu0 0.0
        %1836 = vmatpush1.msra.mxu0 0.0
        %1837 = vmatprep.subr.mxu0 0.0
        %1838 = vmatpush1.msra.mxu0 0.0
        %1839 = vmatprep.subr.mxu0 0.0
        %1840 = vmatpush1.msra.mxu0 0.0
        %1841 = vmatprep.subr.mxu0 0.0
        %v1842 = vand.u32 %v203, 4294901760
        %v1843 = vsub.f32 %v203, %v1842
        %1844 = vmatpush1.msra.mxu0 %v1843
        %1845 = vmatprep.subr.mxu0 0.0
        %v1846 = vand.u32 %v202, 4294901760
        %v1847 = vsub.f32 %v202, %v1846
        %1848 = vmatpush1.msra.mxu0 %v1847
        %1849 = vmatprep.subr.mxu0 0.0
        %1850 = vmatpush2.msra.mxu0 0.0
        %1851 = vmatprep.subr.mxu0 0.0
        %1852 = vmatpush2.msra.mxu0 0.0
        %1853 = vmatprep.subr.mxu0 0.0
        %1854 = vmatpush2.msra.mxu0 0.0
        %1855 = vmatprep.subr.mxu0 0.0
        %1856 = vmatpush2.msra.mxu0 0.0
        %1857 = vmatprep.subr.mxu0 0.0
        %1858 = vmatpush2.msra.mxu0 0.0
        %1859 = vmatprep.subr.mxu0 0.0
        %1860 = vmatpush2.msra.mxu0 0.0
        %1861 = vmatprep.subr.mxu0 0.0
        %1862 = vmatpush2.msra.mxu0 0.0
        %1863 = vmatprep.subr.mxu0 0.0
        %1864 = vmatpush2.msra.mxu0 0.0
        %1865 = vmatprep.subr.mxu0 0.0
        %1866 = vmatpush2.msra.mxu0 0.0
        %1867 = vmatprep.subr.mxu0 0.0
        %1868 = vmatpush2.msra.mxu0 0.0
        %1869 = vmatprep.subr.mxu0 0.0
        %1870 = vmatpush2.msra.mxu0 0.0
        %1871 = vmatprep.subr.mxu0 0.0
        %1872 = vmatpush2.msra.mxu0 0.0
        %1873 = vmatprep.subr.mxu0 0.0
        %1874 = vmatpush2.msra.mxu0 0.0
        %1875 = vmatprep.subr.mxu0 0.0
        %1876 = vmatpush2.msra.mxu0 0.0
        %1877 = vmatprep.subr.mxu0 0.0
        %1878 = vmatpush2.msra.mxu0 0.0
        %1879 = vmatprep.subr.mxu0 0.0
        %1880 = vmatpush2.msra.mxu0 0.0
        %1881 = vmatprep.mubr.f32.mxu0 0.0
        %v1882 = vand.u32 %v1653, 4294901760
        %v1883 = vsub.f32 %v1653, %v1882
        %1884 = vmatmul.mubr.f32.gmra.mxu0 %v1883
        %v1885 = vpop.f32.mrf.mxu0
        %v1886 = vadd.f32 %v1810, %v1885
        %v1887 = vpop.f32.mrf.mxu0
        %1888 = vdwg.mxu0
        %1889 = vmatprep.subr.mxu0 0.0
        %1890 = vmatpush1.msra.mxu0 0.0
        %1891 = vmatprep.subr.mxu0 0.0
        %1892 = vmatpush1.msra.mxu0 0.0
        %1893 = vmatprep.subr.mxu0 0.0
        %1894 = vmatpush1.msra.mxu0 0.0
        %1895 = vmatprep.subr.mxu0 0.0
        %1896 = vmatpush1.msra.mxu0 0.0
        %1897 = vmatprep.subr.mxu0 0.0
        %1898 = vmatpush1.msra.mxu0 0.0
        %1899 = vmatprep.subr.mxu0 0.0
        %1900 = vmatpush1.msra.mxu0 0.0
        %1901 = vmatprep.subr.mxu0 0.0
        %1902 = vmatpush1.msra.mxu0 0.0
        %1903 = vmatprep.subr.mxu0 0.0
        %1904 = vmatpush1.msra.mxu0 0.0
        %1905 = vmatprep.subr.mxu0 0.0
        %1906 = vmatpush1.msra.mxu0 0.0
        %1907 = vmatprep.subr.mxu0 0.0
        %1908 = vmatpush1.msra.mxu0 0.0
        %1909 = vmatprep.subr.mxu0 0.0
        %1910 = vmatpush1.msra.mxu0 0.0
        %1911 = vmatprep.subr.mxu0 0.0
        %1912 = vmatpush1.msra.mxu0 0.0
        %1913 = vmatprep.subr.mxu0 0.0
        %1914 = vmatpush1.msra.mxu0 0.0
        %1915 = vmatprep.subr.mxu0 0.0
        %1916 = vmatpush1.msra.mxu0 0.0
        %1917 = vmatprep.subr.mxu0 0.0
        %v1918 = vand.u32 %v203, 4294901760
        %1919 = vmatpush1.msra.mxu0 %v1918
        %1920 = vmatprep.subr.mxu0 0.0
        %v1921 = vand.u32 %v202, 4294901760
        %1922 = vmatpush1.msra.mxu0 %v1921
        %1923 = vmatprep.subr.mxu0 0.0
        %1924 = vmatpush2.msra.mxu0 0.0
        %1925 = vmatprep.subr.mxu0 0.0
        %1926 = vmatpush2.msra.mxu0 0.0
        %1927 = vmatprep.subr.mxu0 0.0
        %1928 = vmatpush2.msra.mxu0 0.0
        %1929 = vmatprep.subr.mxu0 0.0
        %1930 = vmatpush2.msra.mxu0 0.0
        %1931 = vmatprep.subr.mxu0 0.0
        %1932 = vmatpush2.msra.mxu0 0.0
        %1933 = vmatprep.subr.mxu0 0.0
        %1934 = vmatpush2.msra.mxu0 0.0
        %1935 = vmatprep.subr.mxu0 0.0
        %1936 = vmatpush2.msra.mxu0 0.0
        %1937 = vmatprep.subr.mxu0 0.0
        %1938 = vmatpush2.msra.mxu0 0.0
        %1939 = vmatprep.subr.mxu0 0.0
        %1940 = vmatpush2.msra.mxu0 0.0
        %1941 = vmatprep.subr.mxu0 0.0
        %1942 = vmatpush2.msra.mxu0 0.0
        %1943 = vmatprep.subr.mxu0 0.0
        %1944 = vmatpush2.msra.mxu0 0.0
        %1945 = vmatprep.subr.mxu0 0.0
        %1946 = vmatpush2.msra.mxu0 0.0
        %1947 = vmatprep.subr.mxu0 0.0
        %1948 = vmatpush2.msra.mxu0 0.0
        %1949 = vmatprep.subr.mxu0 0.0
        %1950 = vmatpush2.msra.mxu0 0.0
        %1951 = vmatprep.subr.mxu0 0.0
        %1952 = vmatpush2.msra.mxu0 0.0
        %1953 = vmatprep.subr.mxu0 0.0
        %1954 = vmatpush2.msra.mxu0 0.0
        %1955 = vmatprep.mubr.f32.mxu0 0.0
        %v1956 = vand.u32 %v1653, 4294901760
        %v1957 = vsub.f32 %v1653, %v1956
        %v1958 = vand.u32 %v1957, 4294901760
        %1959 = vmatmul.mubr.f32.gmra.mxu0 %v1958
        %v1960 = vpop.f32.mrf.mxu0
        %v1961 = vadd.f32 %v1886, %v1960
        %v1962 = vpop.f32.mrf.mxu0
        %1963 = vdwg.mxu0
        %1964 = vmatprep.subr.mxu0 0.0
        %1965 = vmatpush1.msra.mxu0 0.0
        %1966 = vmatprep.subr.mxu0 0.0
        %1967 = vmatpush1.msra.mxu0 0.0
        %1968 = vmatprep.subr.mxu0 0.0
        %1969 = vmatpush1.msra.mxu0 0.0
        %1970 = vmatprep.subr.mxu0 0.0
        %1971 = vmatpush1.msra.mxu0 0.0
        %1972 = vmatprep.subr.mxu0 0.0
        %1973 = vmatpush1.msra.mxu0 0.0
        %1974 = vmatprep.subr.mxu0 0.0
        %1975 = vmatpush1.msra.mxu0 0.0
        %1976 = vmatprep.subr.mxu0 0.0
        %1977 = vmatpush1.msra.mxu0 0.0
        %1978 = vmatprep.subr.mxu0 0.0
        %1979 = vmatpush1.msra.mxu0 0.0
        %1980 = vmatprep.subr.mxu0 0.0
        %1981 = vmatpush1.msra.mxu0 0.0
        %1982 = vmatprep.subr.mxu0 0.0
        %1983 = vmatpush1.msra.mxu0 0.0
        %1984 = vmatprep.subr.mxu0 0.0
        %1985 = vmatpush1.msra.mxu0 0.0
        %1986 = vmatprep.subr.mxu0 0.0
        %1987 = vmatpush1.msra.mxu0 0.0
        %1988 = vmatprep.subr.mxu0 0.0
        %1989 = vmatpush1.msra.mxu0 0.0
        %1990 = vmatprep.subr.mxu0 0.0
        %1991 = vmatpush1.msra.mxu0 0.0
        %1992 = vmatprep.subr.mxu0 0.0
        %v1993 = vand.u32 %v203, 4294901760
        %v1994 = vsub.f32 %v203, %v1993
        %v1995 = vand.u32 %v1994, 4294901760
        %1996 = vmatpush1.msra.mxu0 %v1995
        %1997 = vmatprep.subr.mxu0 0.0
        %v1998 = vand.u32 %v202, 4294901760
        %v1999 = vsub.f32 %v202, %v1998
        %v2000 = vand.u32 %v1999, 4294901760
        %2001 = vmatpush1.msra.mxu0 %v2000
        %2002 = vmatprep.subr.mxu0 0.0
        %2003 = vmatpush2.msra.mxu0 0.0
        %2004 = vmatprep.subr.mxu0 0.0
        %2005 = vmatpush2.msra.mxu0 0.0
        %2006 = vmatprep.subr.mxu0 0.0
        %2007 = vmatpush2.msra.mxu0 0.0
        %2008 = vmatprep.subr.mxu0 0.0
        %2009 = vmatpush2.msra.mxu0 0.0
        %2010 = vmatprep.subr.mxu0 0.0
        %2011 = vmatpush2.msra.mxu0 0.0
        %2012 = vmatprep.subr.mxu0 0.0
        %2013 = vmatpush2.msra.mxu0 0.0
        %2014 = vmatprep.subr.mxu0 0.0
        %2015 = vmatpush2.msra.mxu0 0.0
        %2016 = vmatprep.subr.mxu0 0.0
        %2017 = vmatpush2.msra.mxu0 0.0
        %2018 = vmatprep.subr.mxu0 0.0
        %2019 = vmatpush2.msra.mxu0 0.0
        %2020 = vmatprep.subr.mxu0 0.0
        %2021 = vmatpush2.msra.mxu0 0.0
        %2022 = vmatprep.subr.mxu0 0.0
        %2023 = vmatpush2.msra.mxu0 0.0
        %2024 = vmatprep.subr.mxu0 0.0
        %2025 = vmatpush2.msra.mxu0 0.0
        %2026 = vmatprep.subr.mxu0 0.0
        %2027 = vmatpush2.msra.mxu0 0.0
        %2028 = vmatprep.subr.mxu0 0.0
        %2029 = vmatpush2.msra.mxu0 0.0
        %2030 = vmatprep.subr.mxu0 0.0
        %2031 = vmatpush2.msra.mxu0 0.0
        %2032 = vmatprep.subr.mxu0 0.0
        %2033 = vmatpush2.msra.mxu0 0.0
        %2034 = vmatprep.mubr.f32.mxu0 0.0
        %v2035 = vand.u32 %v1653, 4294901760
        %2036 = vmatmul.mubr.f32.gmra.mxu0 %v2035
        %v2037 = vpop.f32.mrf.mxu0
        %v2038 = vadd.f32 %v1961, %v2037
        %v2039 = vpop.f32.mrf.mxu0
        %2040 = vdwg.mxu0
        %2041 = vmatprep.subr.mxu0 0.0
        %2042 = vmatpush1.msra.mxu0 0.0
        %2043 = vmatprep.subr.mxu0 0.0
        %2044 = vmatpush1.msra.mxu0 0.0
        %2045 = vmatprep.subr.mxu0 0.0
        %2046 = vmatpush1.msra.mxu0 0.0
        %2047 = vmatprep.subr.mxu0 0.0
        %2048 = vmatpush1.msra.mxu0 0.0
        %2049 = vmatprep.subr.mxu0 0.0
        %2050 = vmatpush1.msra.mxu0 0.0
        %2051 = vmatprep.subr.mxu0 0.0
        %2052 = vmatpush1.msra.mxu0 0.0
        %2053 = vmatprep.subr.mxu0 0.0
        %2054 = vmatpush1.msra.mxu0 0.0
        %2055 = vmatprep.subr.mxu0 0.0
        %2056 = vmatpush1.msra.mxu0 0.0
        %2057 = vmatprep.subr.mxu0 0.0
        %2058 = vmatpush1.msra.mxu0 0.0
        %2059 = vmatprep.subr.mxu0 0.0
        %2060 = vmatpush1.msra.mxu0 0.0
        %2061 = vmatprep.subr.mxu0 0.0
        %2062 = vmatpush1.msra.mxu0 0.0
        %2063 = vmatprep.subr.mxu0 0.0
        %2064 = vmatpush1.msra.mxu0 0.0
        %2065 = vmatprep.subr.mxu0 0.0
        %2066 = vmatpush1.msra.mxu0 0.0
        %2067 = vmatprep.subr.mxu0 0.0
        %2068 = vmatpush1.msra.mxu0 0.0
        %2069 = vmatprep.subr.mxu0 0.0
        %v2070 = vand.u32 %v203, 4294901760
        %2071 = vmatpush1.msra.mxu0 %v2070
        %2072 = vmatprep.subr.mxu0 0.0
        %v2073 = vand.u32 %v202, 4294901760
        %2074 = vmatpush1.msra.mxu0 %v2073
        %2075 = vmatprep.subr.mxu0 0.0
        %2076 = vmatpush2.msra.mxu0 0.0
        %2077 = vmatprep.subr.mxu0 0.0
        %2078 = vmatpush2.msra.mxu0 0.0
        %2079 = vmatprep.subr.mxu0 0.0
        %2080 = vmatpush2.msra.mxu0 0.0
        %2081 = vmatprep.subr.mxu0 0.0
        %2082 = vmatpush2.msra.mxu0 0.0
        %2083 = vmatprep.subr.mxu0 0.0
        %2084 = vmatpush2.msra.mxu0 0.0
        %2085 = vmatprep.subr.mxu0 0.0
        %2086 = vmatpush2.msra.mxu0 0.0
        %2087 = vmatprep.subr.mxu0 0.0
        %2088 = vmatpush2.msra.mxu0 0.0
        %2089 = vmatprep.subr.mxu0 0.0
        %2090 = vmatpush2.msra.mxu0 0.0
        %2091 = vmatprep.subr.mxu0 0.0
        %2092 = vmatpush2.msra.mxu0 0.0
        %2093 = vmatprep.subr.mxu0 0.0
        %2094 = vmatpush2.msra.mxu0 0.0
        %2095 = vmatprep.subr.mxu0 0.0
        %2096 = vmatpush2.msra.mxu0 0.0
        %2097 = vmatprep.subr.mxu0 0.0
        %2098 = vmatpush2.msra.mxu0 0.0
        %2099 = vmatprep.subr.mxu0 0.0
        %2100 = vmatpush2.msra.mxu0 0.0
        %2101 = vmatprep.subr.mxu0 0.0
        %2102 = vmatpush2.msra.mxu0 0.0
        %2103 = vmatprep.subr.mxu0 0.0
        %2104 = vmatpush2.msra.mxu0 0.0
        %2105 = vmatprep.subr.mxu0 0.0
        %2106 = vmatpush2.msra.mxu0 0.0
        %2107 = vmatprep.mubr.f32.mxu0 0.0
        %v2108 = vand.u32 %v1653, 4294901760
        %2109 = vmatmul.mubr.f32.gmra.mxu0 %v2108
        %v2110 = vpop.f32.mrf.mxu0
        %v2111 = vadd.f32 %v2038, %v2110
        %v2112 = vpop.f32.mrf.mxu0
        %2113 = vdwg.mxu0
        %s2114 = scalar_lea.vmem %s200, 48 [#allocation4]
        %2115 = vst.msk [vmem:[%s2114] sm:$0xf] %vm668, %v2111
        %2117 = vrot.lane.b32.xlu0 %v2111, 124
        %v2118 = vpop.permute.xlu0 %2117
        %s2120 = scalar_lea.vmem %s200, 52 [#allocation4]
        %2121 = vst.msk [vmem:[%s2120] sm:$0xf] %vm668, %v2118
        %2122 = vrot.lane.b32.xlu0 %v2111, 120
        %v2123 = vpop.permute.xlu0 %2122
        %s2125 = scalar_lea.vmem %s200, 56 [#allocation4]
        %2126 = vst.msk [vmem:[%s2125] sm:$0xf] %vm668, %v2123
        %2127 = vrot.lane.b32.xlu0 %v2111, 116
        %v2128 = vpop.permute.xlu0 %2127
        %s2130 = scalar_lea.vmem %s200, 60 [#allocation4]
        %2131 = vst.msk [vmem:[%s2130] sm:$0xf] %vm668, %v2128
        %s2132 = sand.u32 %s109, 1
        %s2133 = sand.u32 %s109, 1
        %s2134 = smul.addr %s2133, 64
        %s2135 = scalar_lea.vmem [#allocation4], %s2134
        // Predicated region
        $region33: #{space_to_depth.1} parent=27 // pred_check
          %p2136 = pneg %p119
        $region34: #{space_to_depth.1} parent=27 // pred_check_branch
          %2138 = sbr.rel (%p2136) target = $region36
        $region35: #{space_to_depth.1} parent=27 // pred_region
          %s2139 = sadd.s32 %s25, %s24
          %s2140 = sadd.s32 %s2139, %s23
          %s2141 = smul.addr %s22, 64
          %s2142 = sadd.s32 %s2140, %s2141
          %s2143 = smul.addr %s2142, 4
          %s2144 = scalar_lea.vmem %s2, %s2143
          // Predicated region
          $region37: #{space_to_depth.1} parent=35 // pred_check
            _
          $region38: #{space_to_depth.1} parent=35 // pred_check_branch
            %2146 = sbr.rel (0) target = $region40
          $region39: #{space_to_depth.1} parent=35 // pred_region
            // Predicated region
            $region41: #{space_to_depth.1} parent=39 // pred_check
              _
            $region42: #{space_to_depth.1} parent=39 // pred_check_branch
              %2148 = sbr.rel target = $region44
            $region43: #{space_to_depth.1} parent=39 // pred_region
              // Predicated region
              $region56: #{space_to_depth.1} parent=43 // pred_check
                _
              $region57: #{space_to_depth.1} parent=43 // pred_check_branch
                %2194 = sbr.rel (0) target = $region59
              $region58: #{space_to_depth.1} parent=43 // pred_region
                loop: start=0, step=1, limit=1
                $region60: #{space_to_depth.1} parent=58 // loop_pre_header
                  _
                $region61: #{space_to_depth.1} parent=58 // loop_header
                  %s2196 = sphi 0, %s2200
                  %p2197 = scmp.ge.s32.totalorder %s2196, 1
                  %s2201 = sphi %s2135, %s2135
                  %s2202 = sphi %s2144, %s2144
                $region62: #{space_to_depth.1} parent=58 // loop_header_branch
                  %2199 = sbr.rel (%p2197) target = $region66
                $region63: #{space_to_depth.1} parent=58 // loop_body
                  _
                $region64: #{space_to_depth.1} parent=58 // loop_footer
                  %s2200 = sadd.s32 1, %s2196
                $region65: #{space_to_depth.1} parent=58 // loop_footer_branch
                  %2195 = sbr.rel target = $region61
                $region66: #{space_to_depth.1} parent=58 // loop_exit
                  _
                %s2204 = ssub.s32 16, 1
                loop: start=0, step=1, limit=1
                $region67: #{space_to_depth.1} parent=58 // loop_pre_header
                  _
                $region68: #{space_to_depth.1} parent=58 // loop_header
                  %s2206 = sphi 0, %s2210
                  %p2207 = scmp.ge.s32.totalorder %s2206, 1
                  %s2211 = sphi %s2135, %s2135
                  %s2212 = sphi %s2144, %s2144
                $region69: #{space_to_depth.1} parent=58 // loop_header_branch
                  %2209 = sbr.rel (%p2207) target = $region73
                $region70: #{space_to_depth.1} parent=58 // loop_body
                  %v2213 = vld [vmem:[%s2211] sm:%s2204]
                  %2214 = vst [vmem:[%s2212] sm:%s2204] %v2213
                  %v2215 = vld [vmem:[%s2211 + $0x4] sm:%s2204]
                  %2216 = vst [vmem:[%s2212 + $0x10] sm:%s2204] %v2215
                  %v2217 = vld [vmem:[%s2211 + $0x8] sm:%s2204]
                  %2218 = vst [vmem:[%s2212 + $0x20] sm:%s2204] %v2217
                  %v2219 = vld [vmem:[%s2211 + $0xc] sm:%s2204]
                  %2220 = vst [vmem:[%s2212 + $0x30] sm:%s2204] %v2219
                  %v2221 = vld [vmem:[%s2211 + $0x10] sm:%s2204]
                  %2222 = vst [vmem:[%s2212 + $0x40] sm:%s2204] %v2221
                  %v2223 = vld [vmem:[%s2211 + $0x14] sm:%s2204]
                  %2224 = vst [vmem:[%s2212 + $0x50] sm:%s2204] %v2223
                  %v2225 = vld [vmem:[%s2211 + $0x18] sm:%s2204]
                  %2226 = vst [vmem:[%s2212 + $0x60] sm:%s2204] %v2225
                  %v2227 = vld [vmem:[%s2211 + $0x1c] sm:%s2204]
                  %2228 = vst [vmem:[%s2212 + $0x70] sm:%s2204] %v2227
                  %v2229 = vld [vmem:[%s2211 + $0x20] sm:%s2204]
                  %2230 = vst [vmem:[%s2212 + $0x80] sm:%s2204] %v2229
                  %v2231 = vld [vmem:[%s2211 + $0x24] sm:%s2204]
                  %2232 = vst [vmem:[%s2212 + $0x90] sm:%s2204] %v2231
                  %v2233 = vld [vmem:[%s2211 + $0x28] sm:%s2204]
                  %2234 = vst [vmem:[%s2212 + $0xa0] sm:%s2204] %v2233
                  %v2235 = vld [vmem:[%s2211 + $0x2c] sm:%s2204]
                  %2236 = vst [vmem:[%s2212 + $0xb0] sm:%s2204] %v2235
                  %v2237 = vld [vmem:[%s2211 + $0x30] sm:%s2204]
                  %2238 = vst [vmem:[%s2212 + $0xc0] sm:%s2204] %v2237
                  %v2239 = vld [vmem:[%s2211 + $0x34] sm:%s2204]
                  %2240 = vst [vmem:[%s2212 + $0xd0] sm:%s2204] %v2239
                  %v2241 = vld [vmem:[%s2211 + $0x38] sm:%s2204]
                  %2242 = vst [vmem:[%s2212 + $0xe0] sm:%s2204] %v2241
                  %v2243 = vld [vmem:[%s2211 + $0x3c] sm:%s2204]
                  %2244 = vst [vmem:[%s2212 + $0xf0] sm:%s2204] %v2243
                $region71: #{space_to_depth.1} parent=58 // loop_footer
                  %s2210 = sadd.s32 1, %s2206
                $region72: #{space_to_depth.1} parent=58 // loop_footer_branch
                  %2205 = sbr.rel target = $region68
                $region73: #{space_to_depth.1} parent=58 // loop_exit
                  _
              $region59: #{space_to_depth.1} parent=43 // pred_fallthru
                _
            $region44: #{space_to_depth.1} parent=39 // pred_fallthru
              _
            // Predicated region
            $region45: #{space_to_depth.1} parent=39 // pred_check
              _
            $region46: #{space_to_depth.1} parent=39 // pred_check_branch
              %2150 = sbr.rel (0) target = $region48
            $region47: #{space_to_depth.1} parent=39 // pred_region
              %s2152 = ssub.s32 16, 1
              loop: start=0, step=1, limit=1
              $region49: #{space_to_depth.1} parent=47 // loop_pre_header
                _
              $region50: #{space_to_depth.1} parent=47 // loop_header
                %s2154 = sphi 0, %s2158
                %p2155 = scmp.ge.s32.totalorder %s2154, 1
                %s2159 = sphi %s2135, %s2135
                %s2160 = sphi %s2144, %s2144
              $region51: #{space_to_depth.1} parent=47 // loop_header_branch
                %2157 = sbr.rel (%p2155) target = $region55
              $region52: #{space_to_depth.1} parent=47 // loop_body
                %v2161 = vld [vmem:[%s2159] sm:%s2152]
                %2162 = vst [vmem:[%s2160] sm:%s2152] %v2161
                %v2163 = vld [vmem:[%s2159 + $0x4] sm:%s2152]
                %2164 = vst [vmem:[%s2160 + $0x10] sm:%s2152] %v2163
                %v2165 = vld [vmem:[%s2159 + $0x8] sm:%s2152]
                %2166 = vst [vmem:[%s2160 + $0x20] sm:%s2152] %v2165
                %v2167 = vld [vmem:[%s2159 + $0xc] sm:%s2152]
                %2168 = vst [vmem:[%s2160 + $0x30] sm:%s2152] %v2167
                %v2169 = vld [vmem:[%s2159 + $0x10] sm:%s2152]
                %2170 = vst [vmem:[%s2160 + $0x40] sm:%s2152] %v2169
                %v2171 = vld [vmem:[%s2159 + $0x14] sm:%s2152]
                %2172 = vst [vmem:[%s2160 + $0x50] sm:%s2152] %v2171
                %v2173 = vld [vmem:[%s2159 + $0x18] sm:%s2152]
                %2174 = vst [vmem:[%s2160 + $0x60] sm:%s2152] %v2173
                %v2175 = vld [vmem:[%s2159 + $0x1c] sm:%s2152]
                %2176 = vst [vmem:[%s2160 + $0x70] sm:%s2152] %v2175
                %v2177 = vld [vmem:[%s2159 + $0x20] sm:%s2152]
                %2178 = vst [vmem:[%s2160 + $0x80] sm:%s2152] %v2177
                %v2179 = vld [vmem:[%s2159 + $0x24] sm:%s2152]
                %2180 = vst [vmem:[%s2160 + $0x90] sm:%s2152] %v2179
                %v2181 = vld [vmem:[%s2159 + $0x28] sm:%s2152]
                %2182 = vst [vmem:[%s2160 + $0xa0] sm:%s2152] %v2181
                %v2183 = vld [vmem:[%s2159 + $0x2c] sm:%s2152]
                %2184 = vst [vmem:[%s2160 + $0xb0] sm:%s2152] %v2183
                %v2185 = vld [vmem:[%s2159 + $0x30] sm:%s2152]
                %2186 = vst [vmem:[%s2160 + $0xc0] sm:%s2152] %v2185
                %v2187 = vld [vmem:[%s2159 + $0x34] sm:%s2152]
                %2188 = vst [vmem:[%s2160 + $0xd0] sm:%s2152] %v2187
                %v2189 = vld [vmem:[%s2159 + $0x38] sm:%s2152]
                %2190 = vst [vmem:[%s2160 + $0xe0] sm:%s2152] %v2189
                %v2191 = vld [vmem:[%s2159 + $0x3c] sm:%s2152]
                %2192 = vst [vmem:[%s2160 + $0xf0] sm:%s2152] %v2191
              $region53: #{space_to_depth.1} parent=47 // loop_footer
                %s2158 = sadd.s32 1, %s2154
              $region54: #{space_to_depth.1} parent=47 // loop_footer_branch
                %2153 = sbr.rel target = $region50
              $region55: #{space_to_depth.1} parent=47 // loop_exit
                _
            $region48: #{space_to_depth.1} parent=39 // pred_fallthru
              _
          $region40: #{space_to_depth.1} parent=35 // pred_fallthru
            _
          %2245 = vnop
        $region36: #{space_to_depth.1} parent=27 // pred_fallthru
          _
      $region28: #{space_to_depth.1} parent=5 // pred_fallthru
        _
      %p2246 = scmp.le.s32.totalorder 2, %s11
      // Predicated region
      $region74: #{space_to_depth.1} parent=5 // pred_check
        %p2247 = pneg %p2246
      $region75: #{space_to_depth.1} parent=5 // pred_check_branch
        %2249 = sbr.rel (%p2247) target = $region77
      $region76: #{space_to_depth.1} parent=5 // pred_region
        %s2250 = ssub.s32 %s11, 2
        // Predicated region
        $region78: #{space_to_depth.1} parent=76 // pred_check
          %p2251 = pneg %p125
        $region79: #{space_to_depth.1} parent=76 // pred_check_branch
          %2253 = sbr.rel (%p2251) target = $region81
        $region80: #{space_to_depth.1} parent=76 // pred_region
          %s2254 = sand.u32 %s110, 1
          %s2255 = sand.u32 %s110, 1
          %s2256 = smul.addr %s2255, 64
          %s2257 = scalar_lea.vmem [#allocation4], %s2256
        $region81: #{space_to_depth.1} parent=76 // pred_fallthru
          _
      $region77: #{space_to_depth.1} parent=5 // pred_fallthru
        _
    $region6: #{space_to_depth.1} parent=1 // loop_footer
      %s15 = sadd.s32 1, %s11
    $region7: #{space_to_depth.1} parent=1 // loop_footer_branch
      %10 = sbr.rel target = $region3
    $region8: #{space_to_depth.1} parent=1 // loop_exit
      _
    %2258 = vsyncpa [#allocation3], 1
    %s2259 = scalar_lea.sflag [#allocation3], 1
    %2260 = vsyncpa %s2259, 1

</llo_original>
